<compile_context>
chip_gen: v5e
topology: v5e:2x2
jax: 0.10.0
libtpu: 0.0.40
codegen_flags: <defaults>
</compile_context>

<pallas_src>
import functools

import jax
import jax.numpy as jnp
from jax.experimental import pallas as pl
from jax.experimental.pallas import tpu as pltpu


def _conv3x3_flat(xflat, w2d, cin, H, W):
    """3x3 conv on a zero-padded, spatially-flattened image.

    xflat: (cin, (H+3)*(W+2)) f32 - padded image, rows of stride W+2 on lanes.
    w2d:   (cout, 9*cin)       - tap-major columns, col = (dy*3+dx)*cin + ci.
    Returns (cout, H*(W+2)) f32 accumulator in "q-space" (row stride W+2);
    columns w in {W, W+1} of each row are garbage and must be discarded.
    """
    Wp = W + 2
    Lq = H * Wp
    cout = w2d.shape[0]
    acc = jnp.zeros((cout, Lq), jnp.float32)
    for t in range(9):
        dy, dx = t // 3, t % 3
        off = dy * Wp + dx
        acc = acc + jnp.dot(w2d[:, t * cin:(t + 1) * cin],
                            xflat[:, off:off + Lq],
                            preferred_element_type=jnp.float32)
    return acc


def _double_conv_kernel(x_ref, w1_ref, s1_ref, b1_ref, w2_ref, s2_ref, b2_ref,
                        o_ref, midp_ref, *, H, W, Cin, Cmid):
    # x_ref:   (1, Cin, (H+3)*(W+2))  padded + flattened input (one image)
    # w1_ref:  (Cmid, 9*Cin)          conv1 weights, tap-major columns
    # w2_ref:  (Cout, 9*Cmid)         conv2 weights, tap-major columns
    # s*/b*:   (C, 1)                 folded BN scale / bias (eval mode)
    # o_ref:   (1, Cout, H*W)         lane-dense output block
    # midp_ref:(Cmid, (H+3)*(W+2))    VMEM scratch: padded+flattened mid act
    Wp = W + 2

    # ---- layer 1: conv3x3 + folded BN + ReLU -------------------------------
    x = x_ref[0]                                           # (Cin, (H+3)*Wp)
    acc1 = _conv3x3_flat(x, w1_ref[...], Cin, H, W)        # (Cmid, H*Wp)
    y1 = jnp.maximum(acc1 * s1_ref[...] + b1_ref[...], 0.0)

    # ---- re-pad the mid activation in VMEM (zero border needed by conv2) ---
    midp_ref[...] = jnp.zeros_like(midp_ref)
    for h in range(H):
        midp_ref[:, (h + 1) * Wp + 1:(h + 1) * Wp + 1 + W] = (
            y1[:, h * Wp:h * Wp + W])

    # ---- layer 2: conv3x3 + folded BN + ReLU -------------------------------
    acc2 = _conv3x3_flat(midp_ref[...], w2_ref[...], Cmid, H, W)
    y2 = jnp.maximum(acc2 * s2_ref[...] + b2_ref[...], 0.0)  # (Cout, H*Wp)

    # ---- compact q-space (row stride W+2) to the dense (Cout, H*W) output --
    for h in range(H):
        o_ref[0, :, h * W:(h + 1) * W] = (
            y2[:, h * Wp:h * Wp + W].astype(o_ref.dtype))


def fold_bn(gamma, beta, running_mean, running_var, eps=1e-5):
    scale = gamma / jnp.sqrt(running_var + eps)
    bias = beta - running_mean * scale
    return scale, bias


def double_conv(x_nchw, params):
    """Fused DoubleConv forward. x_nchw: (N, Cin, H, W), PyTorch layout."""
    N, Cin, H, W = x_nchw.shape
    Cmid = params["w1"].shape[0]
    Cout = params["w2"].shape[0]
    Wp = W + 2
    # Extra bottom pad row absorbs the largest tap offset (2*Wp + 2) so all
    # nine lane-offset slices stay in bounds.
    LP = (H + 3) * Wp
    HW = H * W

    # Single zero-pad (H: 1 top / 2 bottom, W: 1 / 1), then flatten the
    # spatial dims onto the lane axis (contiguous minor-dim reshape: free).
    xp = jnp.pad(x_nchw, ((0, 0), (0, 0), (1, 2), (1, 1))).reshape(N, Cin, LP)

    # OIHW -> (O, 9*I), tap-major columns: col = (dy*3 + dx)*I + i.
    w1 = jnp.transpose(params["w1"], (0, 2, 3, 1)).reshape(Cmid, 9 * Cin)
    w2 = jnp.transpose(params["w2"], (0, 2, 3, 1)).reshape(Cout, 9 * Cmid)

    s1, b1 = fold_bn(params["bn1_gamma"], params["bn1_beta"],
                     params["bn1_mean"], params["bn1_var"])
    s2, b2 = fold_bn(params["bn2_gamma"], params["bn2_beta"],
                     params["bn2_mean"], params["bn2_var"])
    s1 = s1.reshape(Cmid, 1).astype(jnp.float32)
    b1 = b1.reshape(Cmid, 1).astype(jnp.float32)
    s2 = s2.reshape(Cout, 1).astype(jnp.float32)
    b2 = b2.reshape(Cout, 1).astype(jnp.float32)

    kernel = functools.partial(_double_conv_kernel, H=H, W=W, Cin=Cin, Cmid=Cmid)

    out = pl.pallas_call(
        kernel,
        out_shape=jax.ShapeDtypeStruct((N, Cout, HW), x_nchw.dtype),
        grid_spec=pltpu.PrefetchScalarGridSpec(
            num_scalar_prefetch=0,
            grid=(N,),
            in_specs=[
                pl.BlockSpec((1, Cin, LP), lambda n: (n, 0, 0)),
                pl.BlockSpec((Cmid, 9 * Cin), lambda n: (0, 0)),
                pl.BlockSpec((Cmid, 1), lambda n: (0, 0)),
                pl.BlockSpec((Cmid, 1), lambda n: (0, 0)),
                pl.BlockSpec((Cout, 9 * Cmid), lambda n: (0, 0)),
                pl.BlockSpec((Cout, 1), lambda n: (0, 0)),
                pl.BlockSpec((Cout, 1), lambda n: (0, 0)),
            ],
            out_specs=pl.BlockSpec((1, Cout, HW), lambda n: (n, 0, 0)),
            scratch_shapes=[pltpu.VMEM((Cmid, LP), jnp.float32)],
        ),
        compiler_params=pltpu.CompilerParams(
            dimension_semantics=("parallel",),
            vmem_limit_bytes=32 * 1024 * 1024),
    )(xp, w1, s1, b1, w2, s2, b2)

    # Contiguous minor-dim split: free.
    return out.reshape(N, Cout, H, W)


def init_params(key, in_channels, out_channels, mid_channels=None):
    if mid_channels is None:
        mid_channels = out_channels
    k = jax.random.split(key, 8)
    return {
        # Conv weights in PyTorch OIHW layout (bias=False).
        "w1": 0.1 * jax.random.normal(k[0], (mid_channels, in_channels, 3, 3),
                                      jnp.float32),
        "w2": 0.1 * jax.random.normal(k[1], (out_channels, mid_channels, 3, 3),
                                      jnp.float32),
        "bn1_gamma": 1.0 + 0.1 * jax.random.normal(k[2], (mid_channels,), jnp.float32),
        "bn1_beta": 0.1 * jax.random.normal(k[3], (mid_channels,), jnp.float32),
        "bn1_mean": 0.05 * jax.random.normal(k[4], (mid_channels,), jnp.float32),
        "bn1_var": jnp.abs(1.0 + 0.1 * jax.random.normal(k[5], (mid_channels,),
                                                         jnp.float32)),
        "bn2_gamma": 1.0 + 0.1 * jax.random.normal(k[6], (out_channels,), jnp.float32),
        "bn2_beta": 0.1 * jax.random.normal(k[7], (out_channels,), jnp.float32),
        "bn2_mean": jnp.zeros((out_channels,), jnp.float32),
        "bn2_var": jnp.ones((out_channels,), jnp.float32),
    }


if __name__ == "__main__":
    key = jax.random.PRNGKey(0)
    k_x, k_p = jax.random.split(key)

    N, Cin, H, W = 2, 4, 16, 16
    Cout = 8

    x = jax.random.normal(k_x, (N, Cin, H, W), jnp.float32)
    params = init_params(k_p, Cin, Cout)

    out = jax.jit(double_conv)(x, params)
    out = jax.block_until_ready(out)
    assert out.shape == (N, Cout, H, W), out.shape

    # Pure-JAX reference (conv_general_dilated, NCHW/OIHW) for correctness.
    def ref_layer(xn, w, gamma, beta, mean, var, eps=1e-5):
        y = jax.lax.conv_general_dilated(
            xn, w, window_strides=(1, 1), padding=((1, 1), (1, 1)),
            dimension_numbers=("NCHW", "OIHW", "NCHW"))
        inv = gamma / jnp.sqrt(var + eps)
        y = y * inv[None, :, None, None] + (beta - mean * inv)[None, :, None, None]
        return jnp.maximum(y, 0.0)

    r = ref_layer(x, params["w1"], params["bn1_gamma"], params["bn1_beta"],
                  params["bn1_mean"], params["bn1_var"])
    r = ref_layer(r, params["w2"], params["bn2_gamma"], params["bn2_beta"],
                  params["bn2_mean"], params["bn2_var"])

    max_err = float(jnp.max(jnp.abs(out - r)))
    assert jnp.allclose(out, r, atol=1e-3, rtol=1e-3), max_err

    print("KERNEL_OK")
</pallas_src>

<mosaic_0001>
module attributes {stable_mosaic.version = 11 : i64} {
  func.func @_double_conv_kernel(%arg0: i32, %arg1: memref<1x4x342xf32, #tpu.memory_space<vmem>>, %arg2: memref<8x36xf32, #tpu.memory_space<vmem>>, %arg3: memref<8x1xf32, #tpu.memory_space<vmem>>, %arg4: memref<8x1xf32, #tpu.memory_space<vmem>>, %arg5: memref<8x72xf32, #tpu.memory_space<vmem>>, %arg6: memref<8x1xf32, #tpu.memory_space<vmem>>, %arg7: memref<8x1xf32, #tpu.memory_space<vmem>>, %arg8: memref<1x8x256xf32, #tpu.memory_space<vmem>>, %arg9: memref<8x342xf32, #tpu.memory_space<vmem>>) attributes {dimension_semantics = [#tpu.dimension_semantics<parallel>], iteration_bounds = array<i64: 2>, scalar_prefetch = 0 : i64, scratch_operands = 1 : i64, tpu.core_type = #tpu.core_type<tc>, window_params = [{transform_indices = @transform_0, window_bounds = array<i64: 1, 4, 342>}, {pipeline_mode = #tpu.pipeline_mode<synchronous>, transform_indices = @transform_1, window_bounds = array<i64: 8, 36>}, {pipeline_mode = #tpu.pipeline_mode<synchronous>, transform_indices = @transform_2, window_bounds = array<i64: 8, 1>}, {pipeline_mode = #tpu.pipeline_mode<synchronous>, transform_indices = @transform_3, window_bounds = array<i64: 8, 1>}, {pipeline_mode = #tpu.pipeline_mode<synchronous>, transform_indices = @transform_4, window_bounds = array<i64: 8, 72>}, {pipeline_mode = #tpu.pipeline_mode<synchronous>, transform_indices = @transform_5, window_bounds = array<i64: 8, 1>}, {pipeline_mode = #tpu.pipeline_mode<synchronous>, transform_indices = @transform_6, window_bounds = array<i64: 8, 1>}, {transform_indices = @transform_7, window_bounds = array<i64: 1, 8, 256>}]} {
    %c0 = arith.constant 0 : index
    %c0_0 = arith.constant 0 : index
    %c0_1 = arith.constant 0 : index
    %0 = vector.load %arg1[%c0, %c0_0, %c0_1] : memref<1x4x342xf32, #tpu.memory_space<vmem>>, vector<1x4x342xf32>
    %1 = vector.shape_cast %0 : vector<1x4x342xf32> to vector<4x342xf32>
    %c0_2 = arith.constant 0 : index
    %c0_3 = arith.constant 0 : index
    %2 = vector.load %arg2[%c0_2, %c0_3] : memref<8x36xf32, #tpu.memory_space<vmem>>, vector<8x36xf32>
    %cst = arith.constant 0.000000e+00 : f32
    %3 = vector.broadcast %cst : f32 to vector<8x288xf32>
    %4 = vector.extract_strided_slice %2 {offsets = [0, 0], sizes = [8, 4], strides = [1, 1]} : vector<8x36xf32> to vector<8x4xf32>
    %5 = vector.extract_strided_slice %1 {offsets = [0, 0], sizes = [4, 288], strides = [1, 1]} : vector<4x342xf32> to vector<4x288xf32>
    %cst_4 = arith.constant dense<0.000000e+00> : vector<8x288xf32>
    %6 = tpu.matmul %4, %5, %cst_4 {dimension_numbers = #tpu.dot_dimension_numbers<[1], [0], [0], [1], [0, 0, 1, 1], [], []>} : vector<8x4xf32>, vector<4x288xf32>, vector<8x288xf32> -> vector<8x288xf32>
    %7 = arith.addf %3, %6 : vector<8x288xf32>
    %8 = vector.extract_strided_slice %2 {offsets = [0, 4], sizes = [8, 4], strides = [1, 1]} : vector<8x36xf32> to vector<8x4xf32>
    %9 = vector.extract_strided_slice %1 {offsets = [0, 1], sizes = [4, 288], strides = [1, 1]} : vector<4x342xf32> to vector<4x288xf32>
    %cst_5 = arith.constant dense<0.000000e+00> : vector<8x288xf32>
    %10 = tpu.matmul %8, %9, %cst_5 {dimension_numbers = #tpu.dot_dimension_numbers<[1], [0], [0], [1], [0, 0, 1, 1], [], []>} : vector<8x4xf32>, vector<4x288xf32>, vector<8x288xf32> -> vector<8x288xf32>
    %11 = arith.addf %7, %10 : vector<8x288xf32>
    %12 = vector.extract_strided_slice %2 {offsets = [0, 8], sizes = [8, 4], strides = [1, 1]} : vector<8x36xf32> to vector<8x4xf32>
    %13 = vector.extract_strided_slice %1 {offsets = [0, 2], sizes = [4, 288], strides = [1, 1]} : vector<4x342xf32> to vector<4x288xf32>
    %cst_6 = arith.constant dense<0.000000e+00> : vector<8x288xf32>
    %14 = tpu.matmul %12, %13, %cst_6 {dimension_numbers = #tpu.dot_dimension_numbers<[1], [0], [0], [1], [0, 0, 1, 1], [], []>} : vector<8x4xf32>, vector<4x288xf32>, vector<8x288xf32> -> vector<8x288xf32>
    %15 = arith.addf %11, %14 : vector<8x288xf32>
    %16 = vector.extract_strided_slice %2 {offsets = [0, 12], sizes = [8, 4], strides = [1, 1]} : vector<8x36xf32> to vector<8x4xf32>
    %17 = vector.extract_strided_slice %1 {offsets = [0, 18], sizes = [4, 288], strides = [1, 1]} : vector<4x342xf32> to vector<4x288xf32>
    %cst_7 = arith.constant dense<0.000000e+00> : vector<8x288xf32>
    %18 = tpu.matmul %16, %17, %cst_7 {dimension_numbers = #tpu.dot_dimension_numbers<[1], [0], [0], [1], [0, 0, 1, 1], [], []>} : vector<8x4xf32>, vector<4x288xf32>, vector<8x288xf32> -> vector<8x288xf32>
    %19 = arith.addf %15, %18 : vector<8x288xf32>
    %20 = vector.extract_strided_slice %2 {offsets = [0, 16], sizes = [8, 4], strides = [1, 1]} : vector<8x36xf32> to vector<8x4xf32>
    %21 = vector.extract_strided_slice %1 {offsets = [0, 19], sizes = [4, 288], strides = [1, 1]} : vector<4x342xf32> to vector<4x288xf32>
    %cst_8 = arith.constant dense<0.000000e+00> : vector<8x288xf32>
    %22 = tpu.matmul %20, %21, %cst_8 {dimension_numbers = #tpu.dot_dimension_numbers<[1], [0], [0], [1], [0, 0, 1, 1], [], []>} : vector<8x4xf32>, vector<4x288xf32>, vector<8x288xf32> -> vector<8x288xf32>
    %23 = arith.addf %19, %22 : vector<8x288xf32>
    %24 = vector.extract_strided_slice %2 {offsets = [0, 20], sizes = [8, 4], strides = [1, 1]} : vector<8x36xf32> to vector<8x4xf32>
    %25 = vector.extract_strided_slice %1 {offsets = [0, 20], sizes = [4, 288], strides = [1, 1]} : vector<4x342xf32> to vector<4x288xf32>
    %cst_9 = arith.constant dense<0.000000e+00> : vector<8x288xf32>
    %26 = tpu.matmul %24, %25, %cst_9 {dimension_numbers = #tpu.dot_dimension_numbers<[1], [0], [0], [1], [0, 0, 1, 1], [], []>} : vector<8x4xf32>, vector<4x288xf32>, vector<8x288xf32> -> vector<8x288xf32>
    %27 = arith.addf %23, %26 : vector<8x288xf32>
    %28 = vector.extract_strided_slice %2 {offsets = [0, 24], sizes = [8, 4], strides = [1, 1]} : vector<8x36xf32> to vector<8x4xf32>
    %29 = vector.extract_strided_slice %1 {offsets = [0, 36], sizes = [4, 288], strides = [1, 1]} : vector<4x342xf32> to vector<4x288xf32>
    %cst_10 = arith.constant dense<0.000000e+00> : vector<8x288xf32>
    %30 = tpu.matmul %28, %29, %cst_10 {dimension_numbers = #tpu.dot_dimension_numbers<[1], [0], [0], [1], [0, 0, 1, 1], [], []>} : vector<8x4xf32>, vector<4x288xf32>, vector<8x288xf32> -> vector<8x288xf32>
    %31 = arith.addf %27, %30 : vector<8x288xf32>
    %32 = vector.extract_strided_slice %2 {offsets = [0, 28], sizes = [8, 4], strides = [1, 1]} : vector<8x36xf32> to vector<8x4xf32>
    %33 = vector.extract_strided_slice %1 {offsets = [0, 37], sizes = [4, 288], strides = [1, 1]} : vector<4x342xf32> to vector<4x288xf32>
    %cst_11 = arith.constant dense<0.000000e+00> : vector<8x288xf32>
    %34 = tpu.matmul %32, %33, %cst_11 {dimension_numbers = #tpu.dot_dimension_numbers<[1], [0], [0], [1], [0, 0, 1, 1], [], []>} : vector<8x4xf32>, vector<4x288xf32>, vector<8x288xf32> -> vector<8x288xf32>
    %35 = arith.addf %31, %34 : vector<8x288xf32>
    %36 = vector.extract_strided_slice %2 {offsets = [0, 32], sizes = [8, 4], strides = [1, 1]} : vector<8x36xf32> to vector<8x4xf32>
    %37 = vector.extract_strided_slice %1 {offsets = [0, 38], sizes = [4, 288], strides = [1, 1]} : vector<4x342xf32> to vector<4x288xf32>
    %cst_12 = arith.constant dense<0.000000e+00> : vector<8x288xf32>
    %38 = tpu.matmul %36, %37, %cst_12 {dimension_numbers = #tpu.dot_dimension_numbers<[1], [0], [0], [1], [0, 0, 1, 1], [], []>} : vector<8x4xf32>, vector<4x288xf32>, vector<8x288xf32> -> vector<8x288xf32>
    %39 = arith.addf %35, %38 : vector<8x288xf32>
    %c0_13 = arith.constant 0 : index
    %c0_14 = arith.constant 0 : index
    %40 = vector.load %arg3[%c0_13, %c0_14] : memref<8x1xf32, #tpu.memory_space<vmem>>, vector<8x1xf32>
    %41 = vector.broadcast %40 : vector<8x1xf32> to vector<8x288xf32>
    %42 = arith.mulf %39, %41 : vector<8x288xf32>
    %c0_15 = arith.constant 0 : index
    %c0_16 = arith.constant 0 : index
    %43 = vector.load %arg4[%c0_15, %c0_16] : memref<8x1xf32, #tpu.memory_space<vmem>>, vector<8x1xf32>
    %44 = vector.broadcast %43 : vector<8x1xf32> to vector<8x288xf32>
    %45 = arith.addf %42, %44 : vector<8x288xf32>
    %cst_17 = arith.constant 0.000000e+00 : f32
    %46 = vector.broadcast %cst_17 : f32 to vector<8x288xf32>
    %47 = arith.maximumf %45, %46 : vector<8x288xf32>
    %cst_18 = arith.constant 0.000000e+00 : f32
    %48 = vector.broadcast %cst_18 : f32 to vector<8x342xf32>
    %c0_19 = arith.constant 0 : index
    %c0_20 = arith.constant 0 : index
    %49 = vector.load %arg9[%c0_19, %c0_20] : memref<8x342xf32, #tpu.memory_space<vmem>>, vector<8x342xf32>
    tpu.vector_store %arg9[%c0_19, %c0_20], %48 {strides = array<i32>} : memref<8x342xf32, #tpu.memory_space<vmem>>, vector<8x342xf32>,
    %50 = vector.extract_strided_slice %47 {offsets = [0, 0], sizes = [8, 16], strides = [1, 1]} : vector<8x288xf32> to vector<8x16xf32>
    %c0_21 = arith.constant 0 : index
    %c19 = arith.constant 19 : index
    %51 = vector.load %arg9[%c0_21, %c19] : memref<8x342xf32, #tpu.memory_space<vmem>>, vector<8x16xf32>
    tpu.vector_store %arg9[%c0_21, %c19], %50 {strides = array<i32>} : memref<8x342xf32, #tpu.memory_space<vmem>>, vector<8x16xf32>,
    %52 = vector.extract_strided_slice %47 {offsets = [0, 18], sizes = [8, 16], strides = [1, 1]} : vector<8x288xf32> to vector<8x16xf32>
    %c0_22 = arith.constant 0 : index
    %c37 = arith.constant 37 : index
    %53 = vector.load %arg9[%c0_22, %c37] : memref<8x342xf32, #tpu.memory_space<vmem>>, vector<8x16xf32>
    tpu.vector_store %arg9[%c0_22, %c37], %52 {strides = array<i32>} : memref<8x342xf32, #tpu.memory_space<vmem>>, vector<8x16xf32>,
    %54 = vector.extract_strided_slice %47 {offsets = [0, 36], sizes = [8, 16], strides = [1, 1]} : vector<8x288xf32> to vector<8x16xf32>
    %c0_23 = arith.constant 0 : index
    %c55 = arith.constant 55 : index
    %55 = vector.load %arg9[%c0_23, %c55] : memref<8x342xf32, #tpu.memory_space<vmem>>, vector<8x16xf32>
    tpu.vector_store %arg9[%c0_23, %c55], %54 {strides = array<i32>} : memref<8x342xf32, #tpu.memory_space<vmem>>, vector<8x16xf32>,
    %56 = vector.extract_strided_slice %47 {offsets = [0, 54], sizes = [8, 16], strides = [1, 1]} : vector<8x288xf32> to vector<8x16xf32>
    %c0_24 = arith.constant 0 : index
    %c73 = arith.constant 73 : index
    %57 = vector.load %arg9[%c0_24, %c73] : memref<8x342xf32, #tpu.memory_space<vmem>>, vector<8x16xf32>
    tpu.vector_store %arg9[%c0_24, %c73], %56 {strides = array<i32>} : memref<8x342xf32, #tpu.memory_space<vmem>>, vector<8x16xf32>,
    %58 = vector.extract_strided_slice %47 {offsets = [0, 72], sizes = [8, 16], strides = [1, 1]} : vector<8x288xf32> to vector<8x16xf32>
    %c0_25 = arith.constant 0 : index
    %c91 = arith.constant 91 : index
    %59 = vector.load %arg9[%c0_25, %c91] : memref<8x342xf32, #tpu.memory_space<vmem>>, vector<8x16xf32>
    tpu.vector_store %arg9[%c0_25, %c91], %58 {strides = array<i32>} : memref<8x342xf32, #tpu.memory_space<vmem>>, vector<8x16xf32>,
    %60 = vector.extract_strided_slice %47 {offsets = [0, 90], sizes = [8, 16], strides = [1, 1]} : vector<8x288xf32> to vector<8x16xf32>
    %c0_26 = arith.constant 0 : index
    %c109 = arith.constant 109 : index
    %61 = vector.load %arg9[%c0_26, %c109] : memref<8x342xf32, #tpu.memory_space<vmem>>, vector<8x16xf32>
    tpu.vector_store %arg9[%c0_26, %c109], %60 {strides = array<i32>} : memref<8x342xf32, #tpu.memory_space<vmem>>, vector<8x16xf32>,
    %62 = vector.extract_strided_slice %47 {offsets = [0, 108], sizes = [8, 16], strides = [1, 1]} : vector<8x288xf32> to vector<8x16xf32>
    %c0_27 = arith.constant 0 : index
    %c127 = arith.constant 127 : index
    %63 = vector.load %arg9[%c0_27, %c127] : memref<8x342xf32, #tpu.memory_space<vmem>>, vector<8x16xf32>
    tpu.vector_store %arg9[%c0_27, %c127], %62 {strides = array<i32>} : memref<8x342xf32, #tpu.memory_space<vmem>>, vector<8x16xf32>,
    %64 = vector.extract_strided_slice %47 {offsets = [0, 126], sizes = [8, 16], strides = [1, 1]} : vector<8x288xf32> to vector<8x16xf32>
    %c0_28 = arith.constant 0 : index
    %c145 = arith.constant 145 : index
    %65 = vector.load %arg9[%c0_28, %c145] : memref<8x342xf32, #tpu.memory_space<vmem>>, vector<8x16xf32>
    tpu.vector_store %arg9[%c0_28, %c145], %64 {strides = array<i32>} : memref<8x342xf32, #tpu.memory_space<vmem>>, vector<8x16xf32>,
    %66 = vector.extract_strided_slice %47 {offsets = [0, 144], sizes = [8, 16], strides = [1, 1]} : vector<8x288xf32> to vector<8x16xf32>
    %c0_29 = arith.constant 0 : index
    %c163 = arith.constant 163 : index
    %67 = vector.load %arg9[%c0_29, %c163] : memref<8x342xf32, #tpu.memory_space<vmem>>, vector<8x16xf32>
    tpu.vector_store %arg9[%c0_29, %c163], %66 {strides = array<i32>} : memref<8x342xf32, #tpu.memory_space<vmem>>, vector<8x16xf32>,
    %68 = vector.extract_strided_slice %47 {offsets = [0, 162], sizes = [8, 16], strides = [1, 1]} : vector<8x288xf32> to vector<8x16xf32>
    %c0_30 = arith.constant 0 : index
    %c181 = arith.constant 181 : index
    %69 = vector.load %arg9[%c0_30, %c181] : memref<8x342xf32, #tpu.memory_space<vmem>>, vector<8x16xf32>
    tpu.vector_store %arg9[%c0_30, %c181], %68 {strides = array<i32>} : memref<8x342xf32, #tpu.memory_space<vmem>>, vector<8x16xf32>,
    %70 = vector.extract_strided_slice %47 {offsets = [0, 180], sizes = [8, 16], strides = [1, 1]} : vector<8x288xf32> to vector<8x16xf32>
    %c0_31 = arith.constant 0 : index
    %c199 = arith.constant 199 : index
    %71 = vector.load %arg9[%c0_31, %c199] : memref<8x342xf32, #tpu.memory_space<vmem>>, vector<8x16xf32>
    tpu.vector_store %arg9[%c0_31, %c199], %70 {strides = array<i32>} : memref<8x342xf32, #tpu.memory_space<vmem>>, vector<8x16xf32>,
    %72 = vector.extract_strided_slice %47 {offsets = [0, 198], sizes = [8, 16], strides = [1, 1]} : vector<8x288xf32> to vector<8x16xf32>
    %c0_32 = arith.constant 0 : index
    %c217 = arith.constant 217 : index
    %73 = vector.load %arg9[%c0_32, %c217] : memref<8x342xf32, #tpu.memory_space<vmem>>, vector<8x16xf32>
    tpu.vector_store %arg9[%c0_32, %c217], %72 {strides = array<i32>} : memref<8x342xf32, #tpu.memory_space<vmem>>, vector<8x16xf32>,
    %74 = vector.extract_strided_slice %47 {offsets = [0, 216], sizes = [8, 16], strides = [1, 1]} : vector<8x288xf32> to vector<8x16xf32>
    %c0_33 = arith.constant 0 : index
    %c235 = arith.constant 235 : index
    %75 = vector.load %arg9[%c0_33, %c235] : memref<8x342xf32, #tpu.memory_space<vmem>>, vector<8x16xf32>
    tpu.vector_store %arg9[%c0_33, %c235], %74 {strides = array<i32>} : memref<8x342xf32, #tpu.memory_space<vmem>>, vector<8x16xf32>,
    %76 = vector.extract_strided_slice %47 {offsets = [0, 234], sizes = [8, 16], strides = [1, 1]} : vector<8x288xf32> to vector<8x16xf32>
    %c0_34 = arith.constant 0 : index
    %c253 = arith.constant 253 : index
    %77 = vector.load %arg9[%c0_34, %c253] : memref<8x342xf32, #tpu.memory_space<vmem>>, vector<8x16xf32>
    tpu.vector_store %arg9[%c0_34, %c253], %76 {strides = array<i32>} : memref<8x342xf32, #tpu.memory_space<vmem>>, vector<8x16xf32>,
    %78 = vector.extract_strided_slice %47 {offsets = [0, 252], sizes = [8, 16], strides = [1, 1]} : vector<8x288xf32> to vector<8x16xf32>
    %c0_35 = arith.constant 0 : index
    %c271 = arith.constant 271 : index
    %79 = vector.load %arg9[%c0_35, %c271] : memref<8x342xf32, #tpu.memory_space<vmem>>, vector<8x16xf32>
    tpu.vector_store %arg9[%c0_35, %c271], %78 {strides = array<i32>} : memref<8x342xf32, #tpu.memory_space<vmem>>, vector<8x16xf32>,
    %80 = vector.extract_strided_slice %47 {offsets = [0, 270], sizes = [8, 16], strides = [1, 1]} : vector<8x288xf32> to vector<8x16xf32>
    %c0_36 = arith.constant 0 : index
    %c289 = arith.constant 289 : index
    %81 = vector.load %arg9[%c0_36, %c289] : memref<8x342xf32, #tpu.memory_space<vmem>>, vector<8x16xf32>
    tpu.vector_store %arg9[%c0_36, %c289], %80 {strides = array<i32>} : memref<8x342xf32, #tpu.memory_space<vmem>>, vector<8x16xf32>,
    %c0_37 = arith.constant 0 : index
    %c0_38 = arith.constant 0 : index
    %82 = vector.load %arg9[%c0_37, %c0_38] : memref<8x342xf32, #tpu.memory_space<vmem>>, vector<8x342xf32>
    %c0_39 = arith.constant 0 : index
    %c0_40 = arith.constant 0 : index
    %83 = vector.load %arg5[%c0_39, %c0_40] : memref<8x72xf32, #tpu.memory_space<vmem>>, vector<8x72xf32>
    %cst_41 = arith.constant 0.000000e+00 : f32
    %84 = vector.broadcast %cst_41 : f32 to vector<8x288xf32>
    %85 = vector.extract_strided_slice %83 {offsets = [0, 0], sizes = [8, 8], strides = [1, 1]} : vector<8x72xf32> to vector<8x8xf32>
    %86 = vector.extract_strided_slice %82 {offsets = [0, 0], sizes = [8, 288], strides = [1, 1]} : vector<8x342xf32> to vector<8x288xf32>
    %cst_42 = arith.constant dense<0.000000e+00> : vector<8x288xf32>
    %87 = tpu.matmul %85, %86, %cst_42 {dimension_numbers = #tpu.dot_dimension_numbers<[1], [0], [0], [1], [0, 0, 1, 1], [], []>} : vector<8x8xf32>, vector<8x288xf32>, vector<8x288xf32> -> vector<8x288xf32>
    %88 = arith.addf %84, %87 : vector<8x288xf32>
    %89 = vector.extract_strided_slice %83 {offsets = [0, 8], sizes = [8, 8], strides = [1, 1]} : vector<8x72xf32> to vector<8x8xf32>
    %90 = vector.extract_strided_slice %82 {offsets = [0, 1], sizes = [8, 288], strides = [1, 1]} : vector<8x342xf32> to vector<8x288xf32>
    %cst_43 = arith.constant dense<0.000000e+00> : vector<8x288xf32>
    %91 = tpu.matmul %89, %90, %cst_43 {dimension_numbers = #tpu.dot_dimension_numbers<[1], [0], [0], [1], [0, 0, 1, 1], [], []>} : vector<8x8xf32>, vector<8x288xf32>, vector<8x288xf32> -> vector<8x288xf32>
    %92 = arith.addf %88, %91 : vector<8x288xf32>
    %93 = vector.extract_strided_slice %83 {offsets = [0, 16], sizes = [8, 8], strides = [1, 1]} : vector<8x72xf32> to vector<8x8xf32>
    %94 = vector.extract_strided_slice %82 {offsets = [0, 2], sizes = [8, 288], strides = [1, 1]} : vector<8x342xf32> to vector<8x288xf32>
    %cst_44 = arith.constant dense<0.000000e+00> : vector<8x288xf32>
    %95 = tpu.matmul %93, %94, %cst_44 {dimension_numbers = #tpu.dot_dimension_numbers<[1], [0], [0], [1], [0, 0, 1, 1], [], []>} : vector<8x8xf32>, vector<8x288xf32>, vector<8x288xf32> -> vector<8x288xf32>
    %96 = arith.addf %92, %95 : vector<8x288xf32>
    %97 = vector.extract_strided_slice %83 {offsets = [0, 24], sizes = [8, 8], strides = [1, 1]} : vector<8x72xf32> to vector<8x8xf32>
    %98 = vector.extract_strided_slice %82 {offsets = [0, 18], sizes = [8, 288], strides = [1, 1]} : vector<8x342xf32> to vector<8x288xf32>
    %cst_45 = arith.constant dense<0.000000e+00> : vector<8x288xf32>
    %99 = tpu.matmul %97, %98, %cst_45 {dimension_numbers = #tpu.dot_dimension_numbers<[1], [0], [0], [1], [0, 0, 1, 1], [], []>} : vector<8x8xf32>, vector<8x288xf32>, vector<8x288xf32> -> vector<8x288xf32>
    %100 = arith.addf %96, %99 : vector<8x288xf32>
    %101 = vector.extract_strided_slice %83 {offsets = [0, 32], sizes = [8, 8], strides = [1, 1]} : vector<8x72xf32> to vector<8x8xf32>
    %102 = vector.extract_strided_slice %82 {offsets = [0, 19], sizes = [8, 288], strides = [1, 1]} : vector<8x342xf32> to vector<8x288xf32>
    %cst_46 = arith.constant dense<0.000000e+00> : vector<8x288xf32>
    %103 = tpu.matmul %101, %102, %cst_46 {dimension_numbers = #tpu.dot_dimension_numbers<[1], [0], [0], [1], [0, 0, 1, 1], [], []>} : vector<8x8xf32>, vector<8x288xf32>, vector<8x288xf32> -> vector<8x288xf32>
    %104 = arith.addf %100, %103 : vector<8x288xf32>
    %105 = vector.extract_strided_slice %83 {offsets = [0, 40], sizes = [8, 8], strides = [1, 1]} : vector<8x72xf32> to vector<8x8xf32>
    %106 = vector.extract_strided_slice %82 {offsets = [0, 20], sizes = [8, 288], strides = [1, 1]} : vector<8x342xf32> to vector<8x288xf32>
    %cst_47 = arith.constant dense<0.000000e+00> : vector<8x288xf32>
    %107 = tpu.matmul %105, %106, %cst_47 {dimension_numbers = #tpu.dot_dimension_numbers<[1], [0], [0], [1], [0, 0, 1, 1], [], []>} : vector<8x8xf32>, vector<8x288xf32>, vector<8x288xf32> -> vector<8x288xf32>
    %108 = arith.addf %104, %107 : vector<8x288xf32>
    %109 = vector.extract_strided_slice %83 {offsets = [0, 48], sizes = [8, 8], strides = [1, 1]} : vector<8x72xf32> to vector<8x8xf32>
    %110 = vector.extract_strided_slice %82 {offsets = [0, 36], sizes = [8, 288], strides = [1, 1]} : vector<8x342xf32> to vector<8x288xf32>
    %cst_48 = arith.constant dense<0.000000e+00> : vector<8x288xf32>
    %111 = tpu.matmul %109, %110, %cst_48 {dimension_numbers = #tpu.dot_dimension_numbers<[1], [0], [0], [1], [0, 0, 1, 1], [], []>} : vector<8x8xf32>, vector<8x288xf32>, vector<8x288xf32> -> vector<8x288xf32>
    %112 = arith.addf %108, %111 : vector<8x288xf32>
    %113 = vector.extract_strided_slice %83 {offsets = [0, 56], sizes = [8, 8], strides = [1, 1]} : vector<8x72xf32> to vector<8x8xf32>
    %114 = vector.extract_strided_slice %82 {offsets = [0, 37], sizes = [8, 288], strides = [1, 1]} : vector<8x342xf32> to vector<8x288xf32>
    %cst_49 = arith.constant dense<0.000000e+00> : vector<8x288xf32>
    %115 = tpu.matmul %113, %114, %cst_49 {dimension_numbers = #tpu.dot_dimension_numbers<[1], [0], [0], [1], [0, 0, 1, 1], [], []>} : vector<8x8xf32>, vector<8x288xf32>, vector<8x288xf32> -> vector<8x288xf32>
    %116 = arith.addf %112, %115 : vector<8x288xf32>
    %117 = vector.extract_strided_slice %83 {offsets = [0, 64], sizes = [8, 8], strides = [1, 1]} : vector<8x72xf32> to vector<8x8xf32>
    %118 = vector.extract_strided_slice %82 {offsets = [0, 38], sizes = [8, 288], strides = [1, 1]} : vector<8x342xf32> to vector<8x288xf32>
    %cst_50 = arith.constant dense<0.000000e+00> : vector<8x288xf32>
    %119 = tpu.matmul %117, %118, %cst_50 {dimension_numbers = #tpu.dot_dimension_numbers<[1], [0], [0], [1], [0, 0, 1, 1], [], []>} : vector<8x8xf32>, vector<8x288xf32>, vector<8x288xf32> -> vector<8x288xf32>
    %120 = arith.addf %116, %119 : vector<8x288xf32>
    %c0_51 = arith.constant 0 : index
    %c0_52 = arith.constant 0 : index
    %121 = vector.load %arg6[%c0_51, %c0_52] : memref<8x1xf32, #tpu.memory_space<vmem>>, vector<8x1xf32>
    %122 = vector.broadcast %121 : vector<8x1xf32> to vector<8x288xf32>
    %123 = arith.mulf %120, %122 : vector<8x288xf32>
    %c0_53 = arith.constant 0 : index
    %c0_54 = arith.constant 0 : index
    %124 = vector.load %arg7[%c0_53, %c0_54] : memref<8x1xf32, #tpu.memory_space<vmem>>, vector<8x1xf32>
    %125 = vector.broadcast %124 : vector<8x1xf32> to vector<8x288xf32>
    %126 = arith.addf %123, %125 : vector<8x288xf32>
    %cst_55 = arith.constant 0.000000e+00 : f32
    %127 = vector.broadcast %cst_55 : f32 to vector<8x288xf32>
    %128 = arith.maximumf %126, %127 : vector<8x288xf32>
    %129 = vector.extract_strided_slice %128 {offsets = [0, 0], sizes = [8, 16], strides = [1, 1]} : vector<8x288xf32> to vector<8x16xf32>
    %c0_56 = arith.constant 0 : index
    %c0_57 = arith.constant 0 : index
    %c0_58 = arith.constant 0 : index
    %130 = vector.load %arg8[%c0_56, %c0_57, %c0_58] : memref<1x8x256xf32, #tpu.memory_space<vmem>>, vector<1x8x16xf32>
    %131 = vector.shape_cast %130 : vector<1x8x16xf32> to vector<8x16xf32>
    %132 = vector.shape_cast %129 : vector<8x16xf32> to vector<1x8x16xf32>
    tpu.vector_store %arg8[%c0_56, %c0_57, %c0_58], %132 {strides = array<i32>} : memref<1x8x256xf32, #tpu.memory_space<vmem>>, vector<1x8x16xf32>,
    %133 = vector.extract_strided_slice %128 {offsets = [0, 18], sizes = [8, 16], strides = [1, 1]} : vector<8x288xf32> to vector<8x16xf32>
    %c0_59 = arith.constant 0 : index
    %c0_60 = arith.constant 0 : index
    %c16 = arith.constant 16 : index
    %134 = vector.load %arg8[%c0_59, %c0_60, %c16] : memref<1x8x256xf32, #tpu.memory_space<vmem>>, vector<1x8x16xf32>
    %135 = vector.shape_cast %134 : vector<1x8x16xf32> to vector<8x16xf32>
    %136 = vector.shape_cast %133 : vector<8x16xf32> to vector<1x8x16xf32>
    tpu.vector_store %arg8[%c0_59, %c0_60, %c16], %136 {strides = array<i32>} : memref<1x8x256xf32, #tpu.memory_space<vmem>>, vector<1x8x16xf32>,
    %137 = vector.extract_strided_slice %128 {offsets = [0, 36], sizes = [8, 16], strides = [1, 1]} : vector<8x288xf32> to vector<8x16xf32>
    %c0_61 = arith.constant 0 : index
    %c0_62 = arith.constant 0 : index
    %c32 = arith.constant 32 : index
    %138 = vector.load %arg8[%c0_61, %c0_62, %c32] : memref<1x8x256xf32, #tpu.memory_space<vmem>>, vector<1x8x16xf32>
    %139 = vector.shape_cast %138 : vector<1x8x16xf32> to vector<8x16xf32>
    %140 = vector.shape_cast %137 : vector<8x16xf32> to vector<1x8x16xf32>
    tpu.vector_store %arg8[%c0_61, %c0_62, %c32], %140 {strides = array<i32>} : memref<1x8x256xf32, #tpu.memory_space<vmem>>, vector<1x8x16xf32>,
    %141 = vector.extract_strided_slice %128 {offsets = [0, 54], sizes = [8, 16], strides = [1, 1]} : vector<8x288xf32> to vector<8x16xf32>
    %c0_63 = arith.constant 0 : index
    %c0_64 = arith.constant 0 : index
    %c48 = arith.constant 48 : index
    %142 = vector.load %arg8[%c0_63, %c0_64, %c48] : memref<1x8x256xf32, #tpu.memory_space<vmem>>, vector<1x8x16xf32>
    %143 = vector.shape_cast %142 : vector<1x8x16xf32> to vector<8x16xf32>
    %144 = vector.shape_cast %141 : vector<8x16xf32> to vector<1x8x16xf32>
    tpu.vector_store %arg8[%c0_63, %c0_64, %c48], %144 {strides = array<i32>} : memref<1x8x256xf32, #tpu.memory_space<vmem>>, vector<1x8x16xf32>,
    %145 = vector.extract_strided_slice %128 {offsets = [0, 72], sizes = [8, 16], strides = [1, 1]} : vector<8x288xf32> to vector<8x16xf32>
    %c0_65 = arith.constant 0 : index
    %c0_66 = arith.constant 0 : index
    %c64 = arith.constant 64 : index
    %146 = vector.load %arg8[%c0_65, %c0_66, %c64] : memref<1x8x256xf32, #tpu.memory_space<vmem>>, vector<1x8x16xf32>
    %147 = vector.shape_cast %146 : vector<1x8x16xf32> to vector<8x16xf32>
    %148 = vector.shape_cast %145 : vector<8x16xf32> to vector<1x8x16xf32>
    tpu.vector_store %arg8[%c0_65, %c0_66, %c64], %148 {strides = array<i32>} : memref<1x8x256xf32, #tpu.memory_space<vmem>>, vector<1x8x16xf32>,
    %149 = vector.extract_strided_slice %128 {offsets = [0, 90], sizes = [8, 16], strides = [1, 1]} : vector<8x288xf32> to vector<8x16xf32>
    %c0_67 = arith.constant 0 : index
    %c0_68 = arith.constant 0 : index
    %c80 = arith.constant 80 : index
    %150 = vector.load %arg8[%c0_67, %c0_68, %c80] : memref<1x8x256xf32, #tpu.memory_space<vmem>>, vector<1x8x16xf32>
    %151 = vector.shape_cast %150 : vector<1x8x16xf32> to vector<8x16xf32>
    %152 = vector.shape_cast %149 : vector<8x16xf32> to vector<1x8x16xf32>
    tpu.vector_store %arg8[%c0_67, %c0_68, %c80], %152 {strides = array<i32>} : memref<1x8x256xf32, #tpu.memory_space<vmem>>, vector<1x8x16xf32>,
    %153 = vector.extract_strided_slice %128 {offsets = [0, 108], sizes = [8, 16], strides = [1, 1]} : vector<8x288xf32> to vector<8x16xf32>
    %c0_69 = arith.constant 0 : index
    %c0_70 = arith.constant 0 : index
    %c96 = arith.constant 96 : index
    %154 = vector.load %arg8[%c0_69, %c0_70, %c96] : memref<1x8x256xf32, #tpu.memory_space<vmem>>, vector<1x8x16xf32>
    %155 = vector.shape_cast %154 : vector<1x8x16xf32> to vector<8x16xf32>
    %156 = vector.shape_cast %153 : vector<8x16xf32> to vector<1x8x16xf32>
    tpu.vector_store %arg8[%c0_69, %c0_70, %c96], %156 {strides = array<i32>} : memref<1x8x256xf32, #tpu.memory_space<vmem>>, vector<1x8x16xf32>,
    %157 = vector.extract_strided_slice %128 {offsets = [0, 126], sizes = [8, 16], strides = [1, 1]} : vector<8x288xf32> to vector<8x16xf32>
    %c0_71 = arith.constant 0 : index
    %c0_72 = arith.constant 0 : index
    %c112 = arith.constant 112 : index
    %158 = vector.load %arg8[%c0_71, %c0_72, %c112] : memref<1x8x256xf32, #tpu.memory_space<vmem>>, vector<1x8x16xf32>
    %159 = vector.shape_cast %158 : vector<1x8x16xf32> to vector<8x16xf32>
    %160 = vector.shape_cast %157 : vector<8x16xf32> to vector<1x8x16xf32>
    tpu.vector_store %arg8[%c0_71, %c0_72, %c112], %160 {strides = array<i32>} : memref<1x8x256xf32, #tpu.memory_space<vmem>>, vector<1x8x16xf32>,
    %161 = vector.extract_strided_slice %128 {offsets = [0, 144], sizes = [8, 16], strides = [1, 1]} : vector<8x288xf32> to vector<8x16xf32>
    %c0_73 = arith.constant 0 : index
    %c0_74 = arith.constant 0 : index
    %c128 = arith.constant 128 : index
    %162 = vector.load %arg8[%c0_73, %c0_74, %c128] : memref<1x8x256xf32, #tpu.memory_space<vmem>>, vector<1x8x16xf32>
    %163 = vector.shape_cast %162 : vector<1x8x16xf32> to vector<8x16xf32>
    %164 = vector.shape_cast %161 : vector<8x16xf32> to vector<1x8x16xf32>
    tpu.vector_store %arg8[%c0_73, %c0_74, %c128], %164 {strides = array<i32>} : memref<1x8x256xf32, #tpu.memory_space<vmem>>, vector<1x8x16xf32>,
    %165 = vector.extract_strided_slice %128 {offsets = [0, 162], sizes = [8, 16], strides = [1, 1]} : vector<8x288xf32> to vector<8x16xf32>
    %c0_75 = arith.constant 0 : index
    %c0_76 = arith.constant 0 : index
    %c144 = arith.constant 144 : index
    %166 = vector.load %arg8[%c0_75, %c0_76, %c144] : memref<1x8x256xf32, #tpu.memory_space<vmem>>, vector<1x8x16xf32>
    %167 = vector.shape_cast %166 : vector<1x8x16xf32> to vector<8x16xf32>
    %168 = vector.shape_cast %165 : vector<8x16xf32> to vector<1x8x16xf32>
    tpu.vector_store %arg8[%c0_75, %c0_76, %c144], %168 {strides = array<i32>} : memref<1x8x256xf32, #tpu.memory_space<vmem>>, vector<1x8x16xf32>,
    %169 = vector.extract_strided_slice %128 {offsets = [0, 180], sizes = [8, 16], strides = [1, 1]} : vector<8x288xf32> to vector<8x16xf32>
    %c0_77 = arith.constant 0 : index
    %c0_78 = arith.constant 0 : index
    %c160 = arith.constant 160 : index
    %170 = vector.load %arg8[%c0_77, %c0_78, %c160] : memref<1x8x256xf32, #tpu.memory_space<vmem>>, vector<1x8x16xf32>
    %171 = vector.shape_cast %170 : vector<1x8x16xf32> to vector<8x16xf32>
    %172 = vector.shape_cast %169 : vector<8x16xf32> to vector<1x8x16xf32>
    tpu.vector_store %arg8[%c0_77, %c0_78, %c160], %172 {strides = array<i32>} : memref<1x8x256xf32, #tpu.memory_space<vmem>>, vector<1x8x16xf32>,
    %173 = vector.extract_strided_slice %128 {offsets = [0, 198], sizes = [8, 16], strides = [1, 1]} : vector<8x288xf32> to vector<8x16xf32>
    %c0_79 = arith.constant 0 : index
    %c0_80 = arith.constant 0 : index
    %c176 = arith.constant 176 : index
    %174 = vector.load %arg8[%c0_79, %c0_80, %c176] : memref<1x8x256xf32, #tpu.memory_space<vmem>>, vector<1x8x16xf32>
    %175 = vector.shape_cast %174 : vector<1x8x16xf32> to vector<8x16xf32>
    %176 = vector.shape_cast %173 : vector<8x16xf32> to vector<1x8x16xf32>
    tpu.vector_store %arg8[%c0_79, %c0_80, %c176], %176 {strides = array<i32>} : memref<1x8x256xf32, #tpu.memory_space<vmem>>, vector<1x8x16xf32>,
    %177 = vector.extract_strided_slice %128 {offsets = [0, 216], sizes = [8, 16], strides = [1, 1]} : vector<8x288xf32> to vector<8x16xf32>
    %c0_81 = arith.constant 0 : index
    %c0_82 = arith.constant 0 : index
    %c192 = arith.constant 192 : index
    %178 = vector.load %arg8[%c0_81, %c0_82, %c192] : memref<1x8x256xf32, #tpu.memory_space<vmem>>, vector<1x8x16xf32>
    %179 = vector.shape_cast %178 : vector<1x8x16xf32> to vector<8x16xf32>
    %180 = vector.shape_cast %177 : vector<8x16xf32> to vector<1x8x16xf32>
    tpu.vector_store %arg8[%c0_81, %c0_82, %c192], %180 {strides = array<i32>} : memref<1x8x256xf32, #tpu.memory_space<vmem>>, vector<1x8x16xf32>,
    %181 = vector.extract_strided_slice %128 {offsets = [0, 234], sizes = [8, 16], strides = [1, 1]} : vector<8x288xf32> to vector<8x16xf32>
    %c0_83 = arith.constant 0 : index
    %c0_84 = arith.constant 0 : index
    %c208 = arith.constant 208 : index
    %182 = vector.load %arg8[%c0_83, %c0_84, %c208] : memref<1x8x256xf32, #tpu.memory_space<vmem>>, vector<1x8x16xf32>
    %183 = vector.shape_cast %182 : vector<1x8x16xf32> to vector<8x16xf32>
    %184 = vector.shape_cast %181 : vector<8x16xf32> to vector<1x8x16xf32>
    tpu.vector_store %arg8[%c0_83, %c0_84, %c208], %184 {strides = array<i32>} : memref<1x8x256xf32, #tpu.memory_space<vmem>>, vector<1x8x16xf32>,
    %185 = vector.extract_strided_slice %128 {offsets = [0, 252], sizes = [8, 16], strides = [1, 1]} : vector<8x288xf32> to vector<8x16xf32>
    %c0_85 = arith.constant 0 : index
    %c0_86 = arith.constant 0 : index
    %c224 = arith.constant 224 : index
    %186 = vector.load %arg8[%c0_85, %c0_86, %c224] : memref<1x8x256xf32, #tpu.memory_space<vmem>>, vector<1x8x16xf32>
    %187 = vector.shape_cast %186 : vector<1x8x16xf32> to vector<8x16xf32>
    %188 = vector.shape_cast %185 : vector<8x16xf32> to vector<1x8x16xf32>
    tpu.vector_store %arg8[%c0_85, %c0_86, %c224], %188 {strides = array<i32>} : memref<1x8x256xf32, #tpu.memory_space<vmem>>, vector<1x8x16xf32>,
    %189 = vector.extract_strided_slice %128 {offsets = [0, 270], sizes = [8, 16], strides = [1, 1]} : vector<8x288xf32> to vector<8x16xf32>
    %c0_87 = arith.constant 0 : index
    %c0_88 = arith.constant 0 : index
    %c240 = arith.constant 240 : index
    %190 = vector.load %arg8[%c0_87, %c0_88, %c240] : memref<1x8x256xf32, #tpu.memory_space<vmem>>, vector<1x8x16xf32>
    %191 = vector.shape_cast %190 : vector<1x8x16xf32> to vector<8x16xf32>
    %192 = vector.shape_cast %189 : vector<8x16xf32> to vector<1x8x16xf32>
    tpu.vector_store %arg8[%c0_87, %c0_88, %c240], %192 {strides = array<i32>} : memref<1x8x256xf32, #tpu.memory_space<vmem>>, vector<1x8x16xf32>,
    return
  }
  func.func @transform_0(%arg0: i32) -> (i32, i32, i32) {
    %c0_i32 = arith.constant 0 : i32
    %c0_i32_0 = arith.constant 0 : i32
    %c0_i32_1 = arith.constant 0 : i32
    return %arg0, %c0_i32, %c0_i32_0 : i32, i32, i32
  }
  func.func @transform_1(%arg0: i32) -> (i32, i32) {
    %c0_i32 = arith.constant 0 : i32
    %c0_i32_0 = arith.constant 0 : i32
    %c0_i32_1 = arith.constant 0 : i32
    return %c0_i32, %c0_i32_0 : i32, i32
  }
  func.func @transform_2(%arg0: i32) -> (i32, i32) {
    %c0_i32 = arith.constant 0 : i32
    %c0_i32_0 = arith.constant 0 : i32
    %c0_i32_1 = arith.constant 0 : i32
    return %c0_i32, %c0_i32_0 : i32, i32
  }
  func.func @transform_3(%arg0: i32) -> (i32, i32) {
    %c0_i32 = arith.constant 0 : i32
    %c0_i32_0 = arith.constant 0 : i32
    %c0_i32_1 = arith.constant 0 : i32
    return %c0_i32, %c0_i32_0 : i32, i32
  }
  func.func @transform_4(%arg0: i32) -> (i32, i32) {
    %c0_i32 = arith.constant 0 : i32
    %c0_i32_0 = arith.constant 0 : i32
    %c0_i32_1 = arith.constant 0 : i32
    return %c0_i32, %c0_i32_0 : i32, i32
  }
  func.func @transform_5(%arg0: i32) -> (i32, i32) {
    %c0_i32 = arith.constant 0 : i32
    %c0_i32_0 = arith.constant 0 : i32
    %c0_i32_1 = arith.constant 0 : i32
    return %c0_i32, %c0_i32_0 : i32, i32
  }
  func.func @transform_6(%arg0: i32) -> (i32, i32) {
    %c0_i32 = arith.constant 0 : i32
    %c0_i32_0 = arith.constant 0 : i32
    %c0_i32_1 = arith.constant 0 : i32
    return %c0_i32, %c0_i32_0 : i32, i32
  }
  func.func @transform_7(%arg0: i32) -> (i32, i32, i32) {
    %c0_i32 = arith.constant 0 : i32
    %c0_i32_0 = arith.constant 0 : i32
    %c0_i32_1 = arith.constant 0 : i32
    return %arg0, %c0_i32, %c0_i32_0 : i32, i32, i32
  }
}

</mosaic_0001>

<llo_original>
// kernel: double_conv.1
$region0: #{double_conv.1}
  #allocation0 [shape = 'u32[]', space=smem, size = 0x4, offset = 0x4, fixed_abs, tag = 'smem constant byte address 0x4 - core index']
  #allocation1 [shape = 'u32[72,128]{1,0:T(1,128)}', space=vmem, size = 0x9000, scoped, tag = 'internal scratch']
  #allocation2 [shape = 'f32[8,342]{1,0:T(8,128)}', space=vmem, size = 0x3000, scoped, tag = 'scratch operand']
  %s0 = inlined_call_operand.vmem [shape: f32[2,4,342], index: 0, kind: input, shape index: {}]
  %s1 = inlined_call_operand.vmem [shape: f32[8,36], index: 1, kind: input, shape index: {}]
  %s2 = inlined_call_operand.vmem [shape: f32[8,1], index: 2, kind: input, shape index: {}]
  %s3 = inlined_call_operand.vmem [shape: f32[8,1], index: 3, kind: input, shape index: {}]
  %s4 = inlined_call_operand.vmem [shape: f32[8,72], index: 4, kind: input, shape index: {}]
  %s5 = inlined_call_operand.vmem [shape: f32[8,1], index: 5, kind: input, shape index: {}]
  %s6 = inlined_call_operand.vmem [shape: f32[8,1], index: 6, kind: input, shape index: {}]
  %s7 = inlined_call_operand.vmem [shape: f32[2,8,256], index: 7, kind: output, shape index: {}]
  %s8 = sld [smem:[#allocation0]]
  $region61: #{double_conv.1} parent=0
    _
  %s10 = ssub.s32 1, %s8
  %s11 = scalar_select 0, %s10, %s8
  loop: start=0, step=1, limit=4
  $region2: #{double_conv.1} parent=0 // loop_pre_header
    _
  $region3: #{double_conv.1} parent=0 // loop_header
    %s13 = sphi 0, %s17
    %p14 = scmp.ge.s32.totalorder %s13, 4
    %s23 = sphi 0, %s25
    %s26 = sphi 0, %s23
    %s27 = sphi 0, %s26
    %s43 = sphi 0, %s27
    %s47 = sphi 0, %s47
    %s49 = sphi 0, %s47
    %s50 = sphi 0, %s49
    %s64 = sphi 0, %s50
    %s68 = sphi 0, %s68
    %s70 = sphi 0, %s68
    %s71 = sphi 0, %s70
    %s85 = sphi 0, %s71
    %s89 = sphi 0, %s89
    %s91 = sphi 0, %s89
    %s92 = sphi 0, %s91
    %s106 = sphi 0, %s92
    %s110 = sphi 0, %s110
    %s112 = sphi 0, %s110
    %s113 = sphi 0, %s112
    %s127 = sphi 0, %s113
    %s131 = sphi 0, %s131
    %s133 = sphi 0, %s131
    %s134 = sphi 0, %s133
    %s148 = sphi 0, %s134
    %s152 = sphi 0, %s152
    %s154 = sphi 0, %s152
    %s155 = sphi 0, %s154
    %s169 = sphi 0, %s155
    %s175 = sphi 0, %s177
    %s178 = sphi 0, %s175
    %s179 = sphi 0, %s178
    %s195 = sphi 0, %s179
  $region4: #{double_conv.1} parent=0 // loop_header_branch
    %16 = sbr.rel (%p14) target = $region8
  $region5: #{double_conv.1} parent=0 // loop_body
    %s18 = ssub.s32 %s13, 1
    %s19 = ssub.s32 %s13, 2
    %s20 = sadd.s32 %s13, 1
    %s21 = ssub.s32 %s13, %s20
    %p22 = scmp.eq.s32.totalorder %s21, 0
    %s24 = sadd.s32 %s23, 1
    %s25 = scalar_select %p22, %s23, %s24
    %p28 = pneg %p22
    %p29 = scmp.eq.s32.totalorder %s13, 1
    %p30 = por %p28, %p29
    %p31 = scmp.ne.s32.totalorder %s23, %s26
    %p32 = scmp.eq.s32.totalorder %s13, 0
    %p33 = por %p31, %p32
    %p34 = scmp.ne.s32.totalorder %s23, %s26
    %p35 = scmp.eq.s32.totalorder %s18, 1
    %p36 = por %p34, %p35
    %p37 = scmp.ne.s32.totalorder %s26, %s27
    %p38 = scmp.eq.s32.totalorder %s18, 0
    %p39 = por %p37, %p38
    %p40 = scmp.ne.s32.totalorder %s26, %s27
    %p41 = scmp.eq.s32.totalorder %s19, 1
    %p42 = por %p40, %p41
    %p44 = scmp.ne.s32.totalorder %s27, %s43
    %p45 = scmp.eq.s32.totalorder %s19, 0
    %p46 = por %p44, %p45
    %s48 = sadd.s32 %s47, 1
    %p51 = scmp.eq.s32.totalorder %s13, 1
    %p52 = scmp.ne.s32.totalorder %s47, %s49
    %p53 = scmp.eq.s32.totalorder %s13, 0
    %p54 = por %p52, %p53
    %p55 = scmp.ne.s32.totalorder %s47, %s49
    %p56 = scmp.eq.s32.totalorder %s18, 1
    %p57 = por %p55, %p56
    %p58 = scmp.ne.s32.totalorder %s49, %s50
    %p59 = scmp.eq.s32.totalorder %s18, 0
    %p60 = por %p58, %p59
    %p61 = scmp.ne.s32.totalorder %s49, %s50
    %p62 = scmp.eq.s32.totalorder %s19, 1
    %p63 = por %p61, %p62
    %p65 = scmp.ne.s32.totalorder %s50, %s64
    %p66 = scmp.eq.s32.totalorder %s19, 0
    %p67 = por %p65, %p66
    %s69 = sadd.s32 %s68, 1
    %p72 = scmp.eq.s32.totalorder %s13, 1
    %p73 = scmp.ne.s32.totalorder %s68, %s70
    %p74 = scmp.eq.s32.totalorder %s13, 0
    %p75 = por %p73, %p74
    %p76 = scmp.ne.s32.totalorder %s68, %s70
    %p77 = scmp.eq.s32.totalorder %s18, 1
    %p78 = por %p76, %p77
    %p79 = scmp.ne.s32.totalorder %s70, %s71
    %p80 = scmp.eq.s32.totalorder %s18, 0
    %p81 = por %p79, %p80
    %p82 = scmp.ne.s32.totalorder %s70, %s71
    %p83 = scmp.eq.s32.totalorder %s19, 1
    %p84 = por %p82, %p83
    %p86 = scmp.ne.s32.totalorder %s71, %s85
    %p87 = scmp.eq.s32.totalorder %s19, 0
    %p88 = por %p86, %p87
    %s90 = sadd.s32 %s89, 1
    %p93 = scmp.eq.s32.totalorder %s13, 1
    %p94 = scmp.ne.s32.totalorder %s89, %s91
    %p95 = scmp.eq.s32.totalorder %s13, 0
    %p96 = por %p94, %p95
    %p97 = scmp.ne.s32.totalorder %s89, %s91
    %p98 = scmp.eq.s32.totalorder %s18, 1
    %p99 = por %p97, %p98
    %p100 = scmp.ne.s32.totalorder %s91, %s92
    %p101 = scmp.eq.s32.totalorder %s18, 0
    %p102 = por %p100, %p101
    %p103 = scmp.ne.s32.totalorder %s91, %s92
    %p104 = scmp.eq.s32.totalorder %s19, 1
    %p105 = por %p103, %p104
    %p107 = scmp.ne.s32.totalorder %s92, %s106
    %p108 = scmp.eq.s32.totalorder %s19, 0
    %p109 = por %p107, %p108
    %s111 = sadd.s32 %s110, 1
    %p114 = scmp.eq.s32.totalorder %s13, 1
    %p115 = scmp.ne.s32.totalorder %s110, %s112
    %p116 = scmp.eq.s32.totalorder %s13, 0
    %p117 = por %p115, %p116
    %p118 = scmp.ne.s32.totalorder %s110, %s112
    %p119 = scmp.eq.s32.totalorder %s18, 1
    %p120 = por %p118, %p119
    %p121 = scmp.ne.s32.totalorder %s112, %s113
    %p122 = scmp.eq.s32.totalorder %s18, 0
    %p123 = por %p121, %p122
    %p124 = scmp.ne.s32.totalorder %s112, %s113
    %p125 = scmp.eq.s32.totalorder %s19, 1
    %p126 = por %p124, %p125
    %p128 = scmp.ne.s32.totalorder %s113, %s127
    %p129 = scmp.eq.s32.totalorder %s19, 0
    %p130 = por %p128, %p129
    %s132 = sadd.s32 %s131, 1
    %p135 = scmp.eq.s32.totalorder %s13, 1
    %p136 = scmp.ne.s32.totalorder %s131, %s133
    %p137 = scmp.eq.s32.totalorder %s13, 0
    %p138 = por %p136, %p137
    %p139 = scmp.ne.s32.totalorder %s131, %s133
    %p140 = scmp.eq.s32.totalorder %s18, 1
    %p141 = por %p139, %p140
    %p142 = scmp.ne.s32.totalorder %s133, %s134
    %p143 = scmp.eq.s32.totalorder %s18, 0
    %p144 = por %p142, %p143
    %p145 = scmp.ne.s32.totalorder %s133, %s134
    %p146 = scmp.eq.s32.totalorder %s19, 1
    %p147 = por %p145, %p146
    %p149 = scmp.ne.s32.totalorder %s134, %s148
    %p150 = scmp.eq.s32.totalorder %s19, 0
    %p151 = por %p149, %p150
    %s153 = sadd.s32 %s152, 1
    %p156 = scmp.eq.s32.totalorder %s13, 1
    %p157 = scmp.ne.s32.totalorder %s152, %s154
    %p158 = scmp.eq.s32.totalorder %s13, 0
    %p159 = por %p157, %p158
    %p160 = scmp.ne.s32.totalorder %s152, %s154
    %p161 = scmp.eq.s32.totalorder %s18, 1
    %p162 = por %p160, %p161
    %p163 = scmp.ne.s32.totalorder %s154, %s155
    %p164 = scmp.eq.s32.totalorder %s18, 0
    %p165 = por %p163, %p164
    %p166 = scmp.ne.s32.totalorder %s154, %s155
    %p167 = scmp.eq.s32.totalorder %s19, 1
    %p168 = por %p166, %p167
    %p170 = scmp.ne.s32.totalorder %s155, %s169
    %p171 = scmp.eq.s32.totalorder %s19, 0
    %p172 = por %p170, %p171
    %s173 = ssub.s32 %s13, %s20
    %p174 = scmp.eq.s32.totalorder %s173, 0
    %s176 = sadd.s32 %s175, 1
    %s177 = scalar_select %p174, %s175, %s176
    %p180 = pneg %p174
    %p181 = scmp.eq.s32.totalorder %s13, 1
    %p182 = por %p180, %p181
    %p183 = scmp.ne.s32.totalorder %s175, %s178
    %p184 = scmp.eq.s32.totalorder %s13, 0
    %p185 = por %p183, %p184
    %p186 = scmp.ne.s32.totalorder %s175, %s178
    %p187 = scmp.eq.s32.totalorder %s18, 1
    %p188 = por %p186, %p187
    %p189 = scmp.ne.s32.totalorder %s178, %s179
    %p190 = scmp.eq.s32.totalorder %s18, 0
    %p191 = por %p189, %p190
    %p192 = scmp.ne.s32.totalorder %s178, %s179
    %p193 = scmp.eq.s32.totalorder %s19, 1
    %p194 = por %p192, %p193
    %p196 = scmp.ne.s32.totalorder %s179, %s195
    %p197 = scmp.eq.s32.totalorder %s19, 0
    %p198 = por %p196, %p197
    %p199 = scmp.le.s32.totalorder 1, %s13
    %p200 = scmp.lt.s32.totalorder %s13, 3
    %p201 = pnand %p199, %p200
    %p202 = pneg %p201
    // Predicated region
    $region9: #{double_conv.1} parent=5 // pred_check
      _
    $region10: #{double_conv.1} parent=5 // pred_check_branch
      %204 = sbr.rel (%p201) target = $region12
    $region11: #{double_conv.1} parent=5 // pred_region
      %s205 = ssub.s32 %s13, 1
      // Predicated region
      $region13: #{double_conv.1} parent=11 // pred_check
        %p206 = pneg %p60
      $region14: #{double_conv.1} parent=11 // pred_check_branch
        %208 = sbr.rel (%p206) target = $region16
      $region15: #{double_conv.1} parent=11 // pred_region
        _
      $region16: #{double_conv.1} parent=11 // pred_fallthru
        _
      // Predicated region
      $region17: #{double_conv.1} parent=11 // pred_check
        %p209 = pneg %p81
      $region18: #{double_conv.1} parent=11 // pred_check_branch
        %211 = sbr.rel (%p209) target = $region20
      $region19: #{double_conv.1} parent=11 // pred_region
        _
      $region20: #{double_conv.1} parent=11 // pred_fallthru
        _
      // Predicated region
      $region21: #{double_conv.1} parent=11 // pred_check
        %p212 = pneg %p102
      $region22: #{double_conv.1} parent=11 // pred_check_branch
        %214 = sbr.rel (%p212) target = $region24
      $region23: #{double_conv.1} parent=11 // pred_region
        _
      $region24: #{double_conv.1} parent=11 // pred_fallthru
        _
      // Predicated region
      $region25: #{double_conv.1} parent=11 // pred_check
        %p215 = pneg %p123
      $region26: #{double_conv.1} parent=11 // pred_check_branch
        %217 = sbr.rel (%p215) target = $region28
      $region27: #{double_conv.1} parent=11 // pred_region
        _
      $region28: #{double_conv.1} parent=11 // pred_fallthru
        _
      // Predicated region
      $region29: #{double_conv.1} parent=11 // pred_check
        %p218 = pneg %p144
      $region30: #{double_conv.1} parent=11 // pred_check_branch
        %220 = sbr.rel (%p218) target = $region32
      $region31: #{double_conv.1} parent=11 // pred_region
        _
      $region32: #{double_conv.1} parent=11 // pred_fallthru
        _
      // Predicated region
      $region33: #{double_conv.1} parent=11 // pred_check
        %p221 = pneg %p165
      $region34: #{double_conv.1} parent=11 // pred_check_branch
        %223 = sbr.rel (%p221) target = $region36
      $region35: #{double_conv.1} parent=11 // pred_region
        _
      $region36: #{double_conv.1} parent=11 // pred_fallthru
        _
    $region12: #{double_conv.1} parent=5 // pred_fallthru
      _
    %p224 = scmp.lt.s32.totalorder %s13, 2
    // Predicated region
    $region37: #{double_conv.1} parent=5 // pred_check
      %p225 = pneg %p224
    $region38: #{double_conv.1} parent=5 // pred_check_branch
      %227 = sbr.rel (%p225) target = $region40
    $region39: #{double_conv.1} parent=5 // pred_region
      // Predicated region
      $region41: #{double_conv.1} parent=39 // pred_check
        %p228 = pneg %p33
      $region42: #{double_conv.1} parent=39 // pred_check_branch
        %230 = sbr.rel (%p228) target = $region44
      $region43: #{double_conv.1} parent=39 // pred_region
        %p231 = scmp.lt.s32.totalorder %s13, 1
        %s232 = scalar_select %p231, %s13, 1
        %s233 = smul.addr %s232, 3
        %s234 = smul.addr %s233, 4
        %s235 = scalar_lea.vmem %s0, %s234
      $region44: #{double_conv.1} parent=39 // pred_fallthru
        _
    $region40: #{double_conv.1} parent=5 // pred_fallthru
      _
    %p236 = scmp.le.s32.totalorder 1, %s13
    %p237 = scmp.lt.s32.totalorder %s13, 3
    %p238 = pnand %p236, %p237
    %p239 = pneg %p238
    // Predicated region
    $region45: #{double_conv.1} parent=5 // pred_check
      _
    $region46: #{double_conv.1} parent=5 // pred_check_branch
      %241 = sbr.rel (%p238) target = $region48
    $region47: #{double_conv.1} parent=5 // pred_region
      %s242 = ssub.s32 %s13, 1
      %p243 = scmp.lt.s32.totalorder %s18, 1
      %s244 = scalar_select %p243, %s18, 1
      %s245 = smul.addr %s244, 3
      %s246 = smul.addr %s245, 4
      %s247 = scalar_lea.vmem %s0, %s246
      %p248 = pneg %p39
      %p249 = pneg %p36
      %p250 = pneg %p60
      %p251 = pneg %p57
      %p252 = pneg %p81
      %p253 = pneg %p78
      %p254 = pneg %p102
      %p255 = pneg %p99
      %p256 = pneg %p123
      %p257 = pneg %p120
      %p258 = pneg %p144
      %p259 = pneg %p141
      %p260 = pneg %p165
      %p261 = pneg %p162
      %p262 = pneg %p191
      %p263 = pneg %p188
      %p264 = scmp.lt.s32.totalorder %s18, 1
      %s265 = scalar_select %p264, %s18, 1
      %s266 = smul.addr %s265, 2
      %s267 = smul.addr %s266, 8
      %s268 = scalar_lea.vmem %s7, %s267
      %p269 = scmp.lt.s32.totalorder %s18, 1
      %s270 = scalar_select %p269, %s18, 1
      %s271 = smul.addr %s270, 3
      %s272 = smul.addr %s271, 4
      %s273 = scalar_lea.vmem %s0, %s272
      %p274 = scmp.lt.s32.totalorder %s18, 1
      %s275 = scalar_select %p274, %s18, 1
      %s276 = smul.addr %s275, 2
      %s277 = smul.addr %s276, 8
      %s278 = scalar_lea.vmem %s7, %s277
      %v279 = vld [vmem:[%s273] sm:$0xff]
      %v280 = vld [vmem:[%s273 + $0x8] sm:$0xf]
      %v281 = vld [vmem:[%s1] sm:$0xff]
      %283 = vrot.lane.b32.xlu0 %v281, 124
      %v284 = vpop.permute.xlu0 %283
      %287 = vst [vmem:[#allocation1] ss:$2 sm:$0xff] %v279
      %s288 = scalar_lea.vmem [#allocation1], 16
      %289 = vst [vmem:[%s288] ss:$2 sm:$0xff] %v280
      %v290 = vld.sshfl [vmem:[#allocation1] sm:$0xff pattern:$0x75316420]
      %v291 = vld.sshfl [vmem:[#allocation1 + $0x8] sm:$0xff pattern:$0x75316420]
      %v292 = vld.sshfl [vmem:[#allocation1 + $0x10] sm:$0xff pattern:$0x75316420]
      %293 = vrot.lane.b32.xlu0 %v290, 127
      %v294 = vpop.permute.xlu0 %293
      %295 = vrot.lane.b32.xlu0 %v291, 127
      %v296 = vpop.permute.xlu0 %295
      %297 = vrot.lane.b32.xlu0 %v292, 127
      %v298 = vpop.permute.xlu0 %297
      %vm299 = vcmask 1039360
      %v300 = vsel %vm299, %v294, %v296
      %v301 = vsel %vm299, %v296, %v298
      %vm302 = vcmask 31744
      %v303 = vsel %vm302, %v284, 0
      %vm305 = vcmask 1043456
      %v306 = vsel %vm305, %v300, 0
      %v308 = vsel %vm305, %v301, 0
      %v310 = vsel %vm305, %v298, 0
      %312 = vmatpush.msra.mxu0 0.0
      %313 = vmatpush.msra.mxu0 0.0
      %314 = vmatpush.msra.mxu0 0.0
      %315 = vmatpush.msra.mxu0 0.0
      %316 = vmatpush.msra.mxu0 0.0
      %317 = vmatpush.msra.mxu0 0.0
      %318 = vmatpush.msra.mxu0 0.0
      %319 = vmatpush.msra.mxu0 0.0
      %320 = vmatpush.msra.mxu0 0.0
      %321 = vmatpush.msra.mxu0 0.0
      %322 = vmatpush.msra.mxu0 0.0
      %323 = vmatpush.msra.mxu0 0.0
      %324 = vmatpush.msra.mxu0 0.0
      %325 = vmatpush.msra.mxu0 0.0
      %326 = vmatpush.msra.mxu0 0.0
      %327 = vmatpush.msra.mxu0 %v306
      %328 = vmatmul.f32.gmra.mxu0 %v303
      %v329 = vpop.f32.mrf.mxu0
      %v330 = vadd.f32 0.0, %v329
      %331 = vdwg.mxu0
      %332 = vmatpush.msra.mxu0 0.0
      %333 = vmatpush.msra.mxu0 0.0
      %334 = vmatpush.msra.mxu0 0.0
      %335 = vmatpush.msra.mxu0 0.0
      %336 = vmatpush.msra.mxu0 0.0
      %337 = vmatpush.msra.mxu0 0.0
      %338 = vmatpush.msra.mxu0 0.0
      %339 = vmatpush.msra.mxu0 0.0
      %340 = vmatpush.msra.mxu0 0.0
      %341 = vmatpush.msra.mxu0 0.0
      %342 = vmatpush.msra.mxu0 0.0
      %343 = vmatpush.msra.mxu0 0.0
      %344 = vmatpush.msra.mxu0 0.0
      %345 = vmatpush.msra.mxu0 0.0
      %346 = vmatpush.msra.mxu0 0.0
      %347 = vmatpush.msra.mxu0 %v308
      %348 = vmatmul.f32.gmra.mxu0 %v303
      %v349 = vpop.f32.mrf.mxu0
      %v350 = vadd.f32 0.0, %v349
      %351 = vdwg.mxu0
      %352 = vmatpush.msra.mxu0 0.0
      %353 = vmatpush.msra.mxu0 0.0
      %354 = vmatpush.msra.mxu0 0.0
      %355 = vmatpush.msra.mxu0 0.0
      %356 = vmatpush.msra.mxu0 0.0
      %357 = vmatpush.msra.mxu0 0.0
      %358 = vmatpush.msra.mxu0 0.0
      %359 = vmatpush.msra.mxu0 0.0
      %360 = vmatpush.msra.mxu0 0.0
      %361 = vmatpush.msra.mxu0 0.0
      %362 = vmatpush.msra.mxu0 0.0
      %363 = vmatpush.msra.mxu0 0.0
      %364 = vmatpush.msra.mxu0 0.0
      %365 = vmatpush.msra.mxu0 0.0
      %366 = vmatpush.msra.mxu0 0.0
      %367 = vmatpush.msra.mxu0 %v310
      %368 = vmatmul.f32.gmra.mxu0 %v303
      %v369 = vpop.f32.mrf.mxu0
      %v370 = vadd.f32 0.0, %v369
      %371 = vdwg.mxu0
      %372 = vst [vmem:[#allocation1] ss:$2 sm:$0xff] %v279
      %s373 = scalar_lea.vmem [#allocation1], 16
      %374 = vst [vmem:[%s373] ss:$2 sm:$0xff] %v280
      %v375 = vld.sshfl [vmem:[#allocation1] sm:$0xff pattern:$0x75316420]
      %v376 = vld.sshfl [vmem:[#allocation1 + $0x8] sm:$0xff pattern:$0x75316420]
      %v377 = vld.sshfl [vmem:[#allocation1 + $0x10] sm:$0xff pattern:$0x75316420]
      %v378 = vsel %vm302, %v281, 0
      %v380 = vsel %vm305, %v375, 0
      %v382 = vsel %vm305, %v376, 0
      %v384 = vsel %vm305, %v377, 0
      %386 = vmatpush.msra.mxu0 0.0
      %387 = vmatpush.msra.mxu0 0.0
      %388 = vmatpush.msra.mxu0 0.0
      %389 = vmatpush.msra.mxu0 0.0
      %390 = vmatpush.msra.mxu0 0.0
      %391 = vmatpush.msra.mxu0 0.0
      %392 = vmatpush.msra.mxu0 0.0
      %393 = vmatpush.msra.mxu0 0.0
      %394 = vmatpush.msra.mxu0 0.0
      %395 = vmatpush.msra.mxu0 0.0
      %396 = vmatpush.msra.mxu0 0.0
      %397 = vmatpush.msra.mxu0 0.0
      %398 = vmatpush.msra.mxu0 0.0
      %399 = vmatpush.msra.mxu0 0.0
      %400 = vmatpush.msra.mxu0 0.0
      %401 = vmatpush.msra.mxu0 %v380
      %402 = vmatmul.f32.gmra.mxu0 %v378
      %v403 = vpop.f32.mrf.mxu0
      %v404 = vadd.f32 %v330, %v403
      %405 = vdwg.mxu0
      %406 = vmatpush.msra.mxu0 0.0
      %407 = vmatpush.msra.mxu0 0.0
      %408 = vmatpush.msra.mxu0 0.0
      %409 = vmatpush.msra.mxu0 0.0
      %410 = vmatpush.msra.mxu0 0.0
      %411 = vmatpush.msra.mxu0 0.0
      %412 = vmatpush.msra.mxu0 0.0
      %413 = vmatpush.msra.mxu0 0.0
      %414 = vmatpush.msra.mxu0 0.0
      %415 = vmatpush.msra.mxu0 0.0
      %416 = vmatpush.msra.mxu0 0.0
      %417 = vmatpush.msra.mxu0 0.0
      %418 = vmatpush.msra.mxu0 0.0
      %419 = vmatpush.msra.mxu0 0.0
      %420 = vmatpush.msra.mxu0 0.0
      %421 = vmatpush.msra.mxu0 %v382
      %422 = vmatmul.f32.gmra.mxu0 %v378
      %v423 = vpop.f32.mrf.mxu0
      %v424 = vadd.f32 %v350, %v423
      %425 = vdwg.mxu0
      %426 = vmatpush.msra.mxu0 0.0
      %427 = vmatpush.msra.mxu0 0.0
      %428 = vmatpush.msra.mxu0 0.0
      %429 = vmatpush.msra.mxu0 0.0
      %430 = vmatpush.msra.mxu0 0.0
      %431 = vmatpush.msra.mxu0 0.0
      %432 = vmatpush.msra.mxu0 0.0
      %433 = vmatpush.msra.mxu0 0.0
      %434 = vmatpush.msra.mxu0 0.0
      %435 = vmatpush.msra.mxu0 0.0
      %436 = vmatpush.msra.mxu0 0.0
      %437 = vmatpush.msra.mxu0 0.0
      %438 = vmatpush.msra.mxu0 0.0
      %439 = vmatpush.msra.mxu0 0.0
      %440 = vmatpush.msra.mxu0 0.0
      %441 = vmatpush.msra.mxu0 %v384
      %442 = vmatmul.f32.gmra.mxu0 %v378
      %v443 = vpop.f32.mrf.mxu0
      %v444 = vadd.f32 %v370, %v443
      %445 = vdwg.mxu0
      %446 = vrot.lane.b32.xlu0 %v281, 120
      %v447 = vpop.permute.xlu0 %446
      %448 = vst [vmem:[#allocation1] ss:$2 sm:$0xff] %v279
      %s449 = scalar_lea.vmem [#allocation1], 16
      %450 = vst [vmem:[%s449] ss:$2 sm:$0xff] %v280
      %v451 = vld.sshfl [vmem:[#allocation1] sm:$0xff pattern:$0x75316420]
      %v452 = vld.sshfl [vmem:[#allocation1 + $0x8] sm:$0xff pattern:$0x75316420]
      %v453 = vld.sshfl [vmem:[#allocation1 + $0x10] sm:$0xff pattern:$0x75316420]
      %454 = vrot.lane.b32.xlu0 %v451, 126
      %v455 = vpop.permute.xlu0 %454
      %456 = vrot.lane.b32.xlu0 %v452, 126
      %v457 = vpop.permute.xlu0 %456
      %458 = vrot.lane.b32.xlu0 %v453, 126
      %v459 = vpop.permute.xlu0 %458
      %vm460 = vcmask 1031168
      %v461 = vsel %vm460, %v455, %v457
      %v462 = vsel %vm460, %v457, %v459
      %v463 = vsel %vm302, %v447, 0
      %v465 = vsel %vm305, %v461, 0
      %v467 = vsel %vm305, %v462, 0
      %v469 = vsel %vm305, %v459, 0
      %471 = vmatpush.msra.mxu0 0.0
      %472 = vmatpush.msra.mxu0 0.0
      %473 = vmatpush.msra.mxu0 0.0
      %474 = vmatpush.msra.mxu0 0.0
      %475 = vmatpush.msra.mxu0 0.0
      %476 = vmatpush.msra.mxu0 0.0
      %477 = vmatpush.msra.mxu0 0.0
      %478 = vmatpush.msra.mxu0 0.0
      %479 = vmatpush.msra.mxu0 0.0
      %480 = vmatpush.msra.mxu0 0.0
      %481 = vmatpush.msra.mxu0 0.0
      %482 = vmatpush.msra.mxu0 0.0
      %483 = vmatpush.msra.mxu0 0.0
      %484 = vmatpush.msra.mxu0 0.0
      %485 = vmatpush.msra.mxu0 0.0
      %486 = vmatpush.msra.mxu0 %v465
      %487 = vmatmul.f32.gmra.mxu0 %v463
      %v488 = vpop.f32.mrf.mxu0
      %v489 = vadd.f32 0.0, %v488
      %490 = vdwg.mxu0
      %491 = vmatpush.msra.mxu0 0.0
      %492 = vmatpush.msra.mxu0 0.0
      %493 = vmatpush.msra.mxu0 0.0
      %494 = vmatpush.msra.mxu0 0.0
      %495 = vmatpush.msra.mxu0 0.0
      %496 = vmatpush.msra.mxu0 0.0
      %497 = vmatpush.msra.mxu0 0.0
      %498 = vmatpush.msra.mxu0 0.0
      %499 = vmatpush.msra.mxu0 0.0
      %500 = vmatpush.msra.mxu0 0.0
      %501 = vmatpush.msra.mxu0 0.0
      %502 = vmatpush.msra.mxu0 0.0
      %503 = vmatpush.msra.mxu0 0.0
      %504 = vmatpush.msra.mxu0 0.0
      %505 = vmatpush.msra.mxu0 0.0
      %506 = vmatpush.msra.mxu0 %v467
      %507 = vmatmul.f32.gmra.mxu0 %v463
      %v508 = vpop.f32.mrf.mxu0
      %v509 = vadd.f32 0.0, %v508
      %510 = vdwg.mxu0
      %511 = vmatpush.msra.mxu0 0.0
      %512 = vmatpush.msra.mxu0 0.0
      %513 = vmatpush.msra.mxu0 0.0
      %514 = vmatpush.msra.mxu0 0.0
      %515 = vmatpush.msra.mxu0 0.0
      %516 = vmatpush.msra.mxu0 0.0
      %517 = vmatpush.msra.mxu0 0.0
      %518 = vmatpush.msra.mxu0 0.0
      %519 = vmatpush.msra.mxu0 0.0
      %520 = vmatpush.msra.mxu0 0.0
      %521 = vmatpush.msra.mxu0 0.0
      %522 = vmatpush.msra.mxu0 0.0
      %523 = vmatpush.msra.mxu0 0.0
      %524 = vmatpush.msra.mxu0 0.0
      %525 = vmatpush.msra.mxu0 0.0
      %526 = vmatpush.msra.mxu0 %v469
      %527 = vmatmul.f32.gmra.mxu0 %v463
      %v528 = vpop.f32.mrf.mxu0
      %v529 = vadd.f32 0.0, %v528
      %530 = vdwg.mxu0
      %v531 = vadd.f32 %v404, %v489
      %v532 = vadd.f32 %v424, %v509
      %v533 = vadd.f32 %v444, %v529
      %534 = vrot.lane.b32.xlu0 %v281, 116
      %v535 = vpop.permute.xlu0 %534
      %536 = vst [vmem:[#allocation1] ss:$2 sm:$0xff] %v279
      %s537 = scalar_lea.vmem [#allocation1], 16
      %538 = vst [vmem:[%s537] ss:$2 sm:$0xff] %v280
      %v539 = vld.sshfl [vmem:[#allocation1] sm:$0xff pattern:$0x75316420]
      %v540 = vld.sshfl [vmem:[#allocation1 + $0x8] sm:$0xff pattern:$0x75316420]
      %v541 = vld.sshfl [vmem:[#allocation1 + $0x10] sm:$0xff pattern:$0x75316420]
      %542 = vrot.lane.b32.xlu0 %v539, 110
      %v543 = vpop.permute.xlu0 %542
      %544 = vrot.lane.b32.xlu0 %v540, 110
      %v545 = vpop.permute.xlu0 %544
      %546 = vrot.lane.b32.xlu0 %v541, 110
      %v547 = vpop.permute.xlu0 %546
      %vm548 = vcmask 900096
      %v549 = vsel %vm548, %v543, %v545
      %v550 = vsel %vm548, %v545, %v547
      %v551 = vsel %vm302, %v535, 0
      %v553 = vsel %vm305, %v549, 0
      %v555 = vsel %vm305, %v550, 0
      %v557 = vsel %vm305, %v547, 0
      %559 = vmatpush.msra.mxu0 0.0
      %560 = vmatpush.msra.mxu0 0.0
      %561 = vmatpush.msra.mxu0 0.0
      %562 = vmatpush.msra.mxu0 0.0
      %563 = vmatpush.msra.mxu0 0.0
      %564 = vmatpush.msra.mxu0 0.0
      %565 = vmatpush.msra.mxu0 0.0
      %566 = vmatpush.msra.mxu0 0.0
      %567 = vmatpush.msra.mxu0 0.0
      %568 = vmatpush.msra.mxu0 0.0
      %569 = vmatpush.msra.mxu0 0.0
      %570 = vmatpush.msra.mxu0 0.0
      %571 = vmatpush.msra.mxu0 0.0
      %572 = vmatpush.msra.mxu0 0.0
      %573 = vmatpush.msra.mxu0 0.0
      %574 = vmatpush.msra.mxu0 %v553
      %575 = vmatmul.f32.gmra.mxu0 %v551
      %v576 = vpop.f32.mrf.mxu0
      %v577 = vadd.f32 0.0, %v576
      %578 = vdwg.mxu0
      %579 = vmatpush.msra.mxu0 0.0
      %580 = vmatpush.msra.mxu0 0.0
      %581 = vmatpush.msra.mxu0 0.0
      %582 = vmatpush.msra.mxu0 0.0
      %583 = vmatpush.msra.mxu0 0.0
      %584 = vmatpush.msra.mxu0 0.0
      %585 = vmatpush.msra.mxu0 0.0
      %586 = vmatpush.msra.mxu0 0.0
      %587 = vmatpush.msra.mxu0 0.0
      %588 = vmatpush.msra.mxu0 0.0
      %589 = vmatpush.msra.mxu0 0.0
      %590 = vmatpush.msra.mxu0 0.0
      %591 = vmatpush.msra.mxu0 0.0
      %592 = vmatpush.msra.mxu0 0.0
      %593 = vmatpush.msra.mxu0 0.0
      %594 = vmatpush.msra.mxu0 %v555
      %595 = vmatmul.f32.gmra.mxu0 %v551
      %v596 = vpop.f32.mrf.mxu0
      %v597 = vadd.f32 0.0, %v596
      %598 = vdwg.mxu0
      %599 = vmatpush.msra.mxu0 0.0
      %600 = vmatpush.msra.mxu0 0.0
      %601 = vmatpush.msra.mxu0 0.0
      %602 = vmatpush.msra.mxu0 0.0
      %603 = vmatpush.msra.mxu0 0.0
      %604 = vmatpush.msra.mxu0 0.0
      %605 = vmatpush.msra.mxu0 0.0
      %606 = vmatpush.msra.mxu0 0.0
      %607 = vmatpush.msra.mxu0 0.0
      %608 = vmatpush.msra.mxu0 0.0
      %609 = vmatpush.msra.mxu0 0.0
      %610 = vmatpush.msra.mxu0 0.0
      %611 = vmatpush.msra.mxu0 0.0
      %612 = vmatpush.msra.mxu0 0.0
      %613 = vmatpush.msra.mxu0 0.0
      %614 = vmatpush.msra.mxu0 %v557
      %615 = vmatmul.f32.gmra.mxu0 %v551
      %v616 = vpop.f32.mrf.mxu0
      %v617 = vadd.f32 0.0, %v616
      %618 = vdwg.mxu0
      %v619 = vadd.f32 %v531, %v577
      %v620 = vadd.f32 %v532, %v597
      %v621 = vadd.f32 %v533, %v617
      %622 = vrot.lane.b32.xlu0 %v281, 112
      %v623 = vpop.permute.xlu0 %622
      %624 = vst [vmem:[#allocation1] ss:$2 sm:$0xff] %v279
      %s625 = scalar_lea.vmem [#allocation1], 16
      %626 = vst [vmem:[%s625] ss:$2 sm:$0xff] %v280
      %v627 = vld.sshfl [vmem:[#allocation1] sm:$0xff pattern:$0x75316420]
      %v628 = vld.sshfl [vmem:[#allocation1 + $0x8] sm:$0xff pattern:$0x75316420]
      %v629 = vld.sshfl [vmem:[#allocation1 + $0x10] sm:$0xff pattern:$0x75316420]
      %630 = vrot.lane.b32.xlu0 %v627, 109
      %v631 = vpop.permute.xlu0 %630
      %632 = vrot.lane.b32.xlu0 %v628, 109
      %v633 = vpop.permute.xlu0 %632
      %634 = vrot.lane.b32.xlu0 %v629, 109
      %v635 = vpop.permute.xlu0 %634
      %vm636 = vcmask 891904
      %v637 = vsel %vm636, %v631, %v633
      %v638 = vsel %vm636, %v633, %v635
      %v639 = vsel %vm302, %v623, 0
      %v641 = vsel %vm305, %v637, 0
      %v643 = vsel %vm305, %v638, 0
      %v645 = vsel %vm305, %v635, 0
      %647 = vmatpush.msra.mxu0 0.0
      %648 = vmatpush.msra.mxu0 0.0
      %649 = vmatpush.msra.mxu0 0.0
      %650 = vmatpush.msra.mxu0 0.0
      %651 = vmatpush.msra.mxu0 0.0
      %652 = vmatpush.msra.mxu0 0.0
      %653 = vmatpush.msra.mxu0 0.0
      %654 = vmatpush.msra.mxu0 0.0
      %655 = vmatpush.msra.mxu0 0.0
      %656 = vmatpush.msra.mxu0 0.0
      %657 = vmatpush.msra.mxu0 0.0
      %658 = vmatpush.msra.mxu0 0.0
      %659 = vmatpush.msra.mxu0 0.0
      %660 = vmatpush.msra.mxu0 0.0
      %661 = vmatpush.msra.mxu0 0.0
      %662 = vmatpush.msra.mxu0 %v641
      %663 = vmatmul.f32.gmra.mxu0 %v639
      %v664 = vpop.f32.mrf.mxu0
      %v665 = vadd.f32 0.0, %v664
      %666 = vdwg.mxu0
      %667 = vmatpush.msra.mxu0 0.0
      %668 = vmatpush.msra.mxu0 0.0
      %669 = vmatpush.msra.mxu0 0.0
      %670 = vmatpush.msra.mxu0 0.0
      %671 = vmatpush.msra.mxu0 0.0
      %672 = vmatpush.msra.mxu0 0.0
      %673 = vmatpush.msra.mxu0 0.0
      %674 = vmatpush.msra.mxu0 0.0
      %675 = vmatpush.msra.mxu0 0.0
      %676 = vmatpush.msra.mxu0 0.0
      %677 = vmatpush.msra.mxu0 0.0
      %678 = vmatpush.msra.mxu0 0.0
      %679 = vmatpush.msra.mxu0 0.0
      %680 = vmatpush.msra.mxu0 0.0
      %681 = vmatpush.msra.mxu0 0.0
      %682 = vmatpush.msra.mxu0 %v643
      %683 = vmatmul.f32.gmra.mxu0 %v639
      %v684 = vpop.f32.mrf.mxu0
      %v685 = vadd.f32 0.0, %v684
      %686 = vdwg.mxu0
      %687 = vmatpush.msra.mxu0 0.0
      %688 = vmatpush.msra.mxu0 0.0
      %689 = vmatpush.msra.mxu0 0.0
      %690 = vmatpush.msra.mxu0 0.0
      %691 = vmatpush.msra.mxu0 0.0
      %692 = vmatpush.msra.mxu0 0.0
      %693 = vmatpush.msra.mxu0 0.0
      %694 = vmatpush.msra.mxu0 0.0
      %695 = vmatpush.msra.mxu0 0.0
      %696 = vmatpush.msra.mxu0 0.0
      %697 = vmatpush.msra.mxu0 0.0
      %698 = vmatpush.msra.mxu0 0.0
      %699 = vmatpush.msra.mxu0 0.0
      %700 = vmatpush.msra.mxu0 0.0
      %701 = vmatpush.msra.mxu0 0.0
      %702 = vmatpush.msra.mxu0 %v645
      %703 = vmatmul.f32.gmra.mxu0 %v639
      %v704 = vpop.f32.mrf.mxu0
      %v705 = vadd.f32 0.0, %v704
      %706 = vdwg.mxu0
      %v707 = vadd.f32 %v619, %v665
      %v708 = vadd.f32 %v620, %v685
      %v709 = vadd.f32 %v621, %v705
      %710 = vrot.lane.b32.xlu0 %v281, 108
      %v711 = vpop.permute.xlu0 %710
      %712 = vst [vmem:[#allocation1] ss:$2 sm:$0xff] %v279
      %s713 = scalar_lea.vmem [#allocation1], 16
      %714 = vst [vmem:[%s713] ss:$2 sm:$0xff] %v280
      %v715 = vld.sshfl [vmem:[#allocation1] sm:$0xff pattern:$0x75316420]
      %v716 = vld.sshfl [vmem:[#allocation1 + $0x8] sm:$0xff pattern:$0x75316420]
      %v717 = vld.sshfl [vmem:[#allocation1 + $0x10] sm:$0xff pattern:$0x75316420]
      %718 = vrot.lane.b32.xlu0 %v715, 108
      %v719 = vpop.permute.xlu0 %718
      %720 = vrot.lane.b32.xlu0 %v716, 108
      %v721 = vpop.permute.xlu0 %720
      %722 = vrot.lane.b32.xlu0 %v717, 108
      %v723 = vpop.permute.xlu0 %722
      %vm724 = vcmask 883712
      %v725 = vsel %vm724, %v719, %v721
      %v726 = vsel %vm724, %v721, %v723
      %v727 = vsel %vm302, %v711, 0
      %v729 = vsel %vm305, %v725, 0
      %v731 = vsel %vm305, %v726, 0
      %v733 = vsel %vm305, %v723, 0
      %735 = vmatpush.msra.mxu0 0.0
      %736 = vmatpush.msra.mxu0 0.0
      %737 = vmatpush.msra.mxu0 0.0
      %738 = vmatpush.msra.mxu0 0.0
      %739 = vmatpush.msra.mxu0 0.0
      %740 = vmatpush.msra.mxu0 0.0
      %741 = vmatpush.msra.mxu0 0.0
      %742 = vmatpush.msra.mxu0 0.0
      %743 = vmatpush.msra.mxu0 0.0
      %744 = vmatpush.msra.mxu0 0.0
      %745 = vmatpush.msra.mxu0 0.0
      %746 = vmatpush.msra.mxu0 0.0
      %747 = vmatpush.msra.mxu0 0.0
      %748 = vmatpush.msra.mxu0 0.0
      %749 = vmatpush.msra.mxu0 0.0
      %750 = vmatpush.msra.mxu0 %v729
      %751 = vmatmul.f32.gmra.mxu0 %v727
      %v752 = vpop.f32.mrf.mxu0
      %v753 = vadd.f32 0.0, %v752
      %754 = vdwg.mxu0
      %755 = vmatpush.msra.mxu0 0.0
      %756 = vmatpush.msra.mxu0 0.0
      %757 = vmatpush.msra.mxu0 0.0
      %758 = vmatpush.msra.mxu0 0.0
      %759 = vmatpush.msra.mxu0 0.0
      %760 = vmatpush.msra.mxu0 0.0
      %761 = vmatpush.msra.mxu0 0.0
      %762 = vmatpush.msra.mxu0 0.0
      %763 = vmatpush.msra.mxu0 0.0
      %764 = vmatpush.msra.mxu0 0.0
      %765 = vmatpush.msra.mxu0 0.0
      %766 = vmatpush.msra.mxu0 0.0
      %767 = vmatpush.msra.mxu0 0.0
      %768 = vmatpush.msra.mxu0 0.0
      %769 = vmatpush.msra.mxu0 0.0
      %770 = vmatpush.msra.mxu0 %v731
      %771 = vmatmul.f32.gmra.mxu0 %v727
      %v772 = vpop.f32.mrf.mxu0
      %v773 = vadd.f32 0.0, %v772
      %774 = vdwg.mxu0
      %775 = vmatpush.msra.mxu0 0.0
      %776 = vmatpush.msra.mxu0 0.0
      %777 = vmatpush.msra.mxu0 0.0
      %778 = vmatpush.msra.mxu0 0.0
      %779 = vmatpush.msra.mxu0 0.0
      %780 = vmatpush.msra.mxu0 0.0
      %781 = vmatpush.msra.mxu0 0.0
      %782 = vmatpush.msra.mxu0 0.0
      %783 = vmatpush.msra.mxu0 0.0
      %784 = vmatpush.msra.mxu0 0.0
      %785 = vmatpush.msra.mxu0 0.0
      %786 = vmatpush.msra.mxu0 0.0
      %787 = vmatpush.msra.mxu0 0.0
      %788 = vmatpush.msra.mxu0 0.0
      %789 = vmatpush.msra.mxu0 0.0
      %790 = vmatpush.msra.mxu0 %v733
      %791 = vmatmul.f32.gmra.mxu0 %v727
      %v792 = vpop.f32.mrf.mxu0
      %v793 = vadd.f32 0.0, %v792
      %794 = vdwg.mxu0
      %v795 = vadd.f32 %v707, %v753
      %v796 = vadd.f32 %v708, %v773
      %v797 = vadd.f32 %v709, %v793
      %798 = vrot.lane.b32.xlu0 %v281, 104
      %v799 = vpop.permute.xlu0 %798
      %800 = vst [vmem:[#allocation1] ss:$2 sm:$0xff] %v279
      %s801 = scalar_lea.vmem [#allocation1], 16
      %802 = vst [vmem:[%s801] ss:$2 sm:$0xff] %v280
      %v803 = vld.sshfl [vmem:[#allocation1] sm:$0xff pattern:$0x75316420]
      %v804 = vld.sshfl [vmem:[#allocation1 + $0x8] sm:$0xff pattern:$0x75316420]
      %v805 = vld.sshfl [vmem:[#allocation1 + $0x10] sm:$0xff pattern:$0x75316420]
      %806 = vrot.lane.b32.xlu0 %v803, 92
      %v807 = vpop.permute.xlu0 %806
      %808 = vrot.lane.b32.xlu0 %v804, 92
      %v809 = vpop.permute.xlu0 %808
      %810 = vrot.lane.b32.xlu0 %v805, 92
      %v811 = vpop.permute.xlu0 %810
      %vm812 = vcmask 752640
      %v813 = vsel %vm812, %v807, %v809
      %v814 = vsel %vm812, %v809, %v811
      %v815 = vsel %vm302, %v799, 0
      %v817 = vsel %vm305, %v813, 0
      %v819 = vsel %vm305, %v814, 0
      %v821 = vsel %vm305, %v811, 0
      %823 = vmatpush.msra.mxu0 0.0
      %824 = vmatpush.msra.mxu0 0.0
      %825 = vmatpush.msra.mxu0 0.0
      %826 = vmatpush.msra.mxu0 0.0
      %827 = vmatpush.msra.mxu0 0.0
      %828 = vmatpush.msra.mxu0 0.0
      %829 = vmatpush.msra.mxu0 0.0
      %830 = vmatpush.msra.mxu0 0.0
      %831 = vmatpush.msra.mxu0 0.0
      %832 = vmatpush.msra.mxu0 0.0
      %833 = vmatpush.msra.mxu0 0.0
      %834 = vmatpush.msra.mxu0 0.0
      %835 = vmatpush.msra.mxu0 0.0
      %836 = vmatpush.msra.mxu0 0.0
      %837 = vmatpush.msra.mxu0 0.0
      %838 = vmatpush.msra.mxu0 %v817
      %839 = vmatmul.f32.gmra.mxu0 %v815
      %v840 = vpop.f32.mrf.mxu0
      %v841 = vadd.f32 0.0, %v840
      %842 = vdwg.mxu0
      %843 = vmatpush.msra.mxu0 0.0
      %844 = vmatpush.msra.mxu0 0.0
      %845 = vmatpush.msra.mxu0 0.0
      %846 = vmatpush.msra.mxu0 0.0
      %847 = vmatpush.msra.mxu0 0.0
      %848 = vmatpush.msra.mxu0 0.0
      %849 = vmatpush.msra.mxu0 0.0
      %850 = vmatpush.msra.mxu0 0.0
      %851 = vmatpush.msra.mxu0 0.0
      %852 = vmatpush.msra.mxu0 0.0
      %853 = vmatpush.msra.mxu0 0.0
      %854 = vmatpush.msra.mxu0 0.0
      %855 = vmatpush.msra.mxu0 0.0
      %856 = vmatpush.msra.mxu0 0.0
      %857 = vmatpush.msra.mxu0 0.0
      %858 = vmatpush.msra.mxu0 %v819
      %859 = vmatmul.f32.gmra.mxu0 %v815
      %v860 = vpop.f32.mrf.mxu0
      %v861 = vadd.f32 0.0, %v860
      %862 = vdwg.mxu0
      %863 = vmatpush.msra.mxu0 0.0
      %864 = vmatpush.msra.mxu0 0.0
      %865 = vmatpush.msra.mxu0 0.0
      %866 = vmatpush.msra.mxu0 0.0
      %867 = vmatpush.msra.mxu0 0.0
      %868 = vmatpush.msra.mxu0 0.0
      %869 = vmatpush.msra.mxu0 0.0
      %870 = vmatpush.msra.mxu0 0.0
      %871 = vmatpush.msra.mxu0 0.0
      %872 = vmatpush.msra.mxu0 0.0
      %873 = vmatpush.msra.mxu0 0.0
      %874 = vmatpush.msra.mxu0 0.0
      %875 = vmatpush.msra.mxu0 0.0
      %876 = vmatpush.msra.mxu0 0.0
      %877 = vmatpush.msra.mxu0 0.0
      %878 = vmatpush.msra.mxu0 %v821
      %879 = vmatmul.f32.gmra.mxu0 %v815
      %v880 = vpop.f32.mrf.mxu0
      %v881 = vadd.f32 0.0, %v880
      %882 = vdwg.mxu0
      %v883 = vadd.f32 %v795, %v841
      %v884 = vadd.f32 %v796, %v861
      %v885 = vadd.f32 %v797, %v881
      %886 = vrot.lane.b32.xlu0 %v281, 100
      %v887 = vpop.permute.xlu0 %886
      %888 = vst [vmem:[#allocation1] ss:$2 sm:$0xff] %v279
      %s889 = scalar_lea.vmem [#allocation1], 16
      %890 = vst [vmem:[%s889] ss:$2 sm:$0xff] %v280
      %v891 = vld.sshfl [vmem:[#allocation1] sm:$0xff pattern:$0x75316420]
      %v892 = vld.sshfl [vmem:[#allocation1 + $0x8] sm:$0xff pattern:$0x75316420]
      %v893 = vld.sshfl [vmem:[#allocation1 + $0x10] sm:$0xff pattern:$0x75316420]
      %894 = vrot.lane.b32.xlu0 %v891, 91
      %v895 = vpop.permute.xlu0 %894
      %896 = vrot.lane.b32.xlu0 %v892, 91
      %v897 = vpop.permute.xlu0 %896
      %898 = vrot.lane.b32.xlu0 %v893, 91
      %v899 = vpop.permute.xlu0 %898
      %vm900 = vcmask 744448
      %v901 = vsel %vm900, %v895, %v897
      %v902 = vsel %vm900, %v897, %v899
      %v903 = vsel %vm302, %v887, 0
      %v905 = vsel %vm305, %v901, 0
      %v907 = vsel %vm305, %v902, 0
      %v909 = vsel %vm305, %v899, 0
      %911 = vmatpush.msra.mxu0 0.0
      %912 = vmatpush.msra.mxu0 0.0
      %913 = vmatpush.msra.mxu0 0.0
      %914 = vmatpush.msra.mxu0 0.0
      %915 = vmatpush.msra.mxu0 0.0
      %916 = vmatpush.msra.mxu0 0.0
      %917 = vmatpush.msra.mxu0 0.0
      %918 = vmatpush.msra.mxu0 0.0
      %919 = vmatpush.msra.mxu0 0.0
      %920 = vmatpush.msra.mxu0 0.0
      %921 = vmatpush.msra.mxu0 0.0
      %922 = vmatpush.msra.mxu0 0.0
      %923 = vmatpush.msra.mxu0 0.0
      %924 = vmatpush.msra.mxu0 0.0
      %925 = vmatpush.msra.mxu0 0.0
      %926 = vmatpush.msra.mxu0 %v905
      %927 = vmatmul.f32.gmra.mxu0 %v903
      %v928 = vpop.f32.mrf.mxu0
      %v929 = vadd.f32 0.0, %v928
      %930 = vdwg.mxu0
      %931 = vmatpush.msra.mxu0 0.0
      %932 = vmatpush.msra.mxu0 0.0
      %933 = vmatpush.msra.mxu0 0.0
      %934 = vmatpush.msra.mxu0 0.0
      %935 = vmatpush.msra.mxu0 0.0
      %936 = vmatpush.msra.mxu0 0.0
      %937 = vmatpush.msra.mxu0 0.0
      %938 = vmatpush.msra.mxu0 0.0
      %939 = vmatpush.msra.mxu0 0.0
      %940 = vmatpush.msra.mxu0 0.0
      %941 = vmatpush.msra.mxu0 0.0
      %942 = vmatpush.msra.mxu0 0.0
      %943 = vmatpush.msra.mxu0 0.0
      %944 = vmatpush.msra.mxu0 0.0
      %945 = vmatpush.msra.mxu0 0.0
      %946 = vmatpush.msra.mxu0 %v907
      %947 = vmatmul.f32.gmra.mxu0 %v903
      %v948 = vpop.f32.mrf.mxu0
      %v949 = vadd.f32 0.0, %v948
      %950 = vdwg.mxu0
      %951 = vmatpush.msra.mxu0 0.0
      %952 = vmatpush.msra.mxu0 0.0
      %953 = vmatpush.msra.mxu0 0.0
      %954 = vmatpush.msra.mxu0 0.0
      %955 = vmatpush.msra.mxu0 0.0
      %956 = vmatpush.msra.mxu0 0.0
      %957 = vmatpush.msra.mxu0 0.0
      %958 = vmatpush.msra.mxu0 0.0
      %959 = vmatpush.msra.mxu0 0.0
      %960 = vmatpush.msra.mxu0 0.0
      %961 = vmatpush.msra.mxu0 0.0
      %962 = vmatpush.msra.mxu0 0.0
      %963 = vmatpush.msra.mxu0 0.0
      %964 = vmatpush.msra.mxu0 0.0
      %965 = vmatpush.msra.mxu0 0.0
      %966 = vmatpush.msra.mxu0 %v909
      %967 = vmatmul.f32.gmra.mxu0 %v903
      %v968 = vpop.f32.mrf.mxu0
      %v969 = vadd.f32 0.0, %v968
      %970 = vdwg.mxu0
      %v971 = vadd.f32 %v883, %v929
      %v972 = vadd.f32 %v884, %v949
      %v973 = vadd.f32 %v885, %v969
      %974 = vrot.lane.b32.xlu0 %v281, 96
      %v975 = vpop.permute.xlu0 %974
      %976 = vst [vmem:[#allocation1] ss:$2 sm:$0xff] %v279
      %s977 = scalar_lea.vmem [#allocation1], 16
      %978 = vst [vmem:[%s977] ss:$2 sm:$0xff] %v280
      %v979 = vld.sshfl [vmem:[#allocation1] sm:$0xff pattern:$0x75316420]
      %v980 = vld.sshfl [vmem:[#allocation1 + $0x8] sm:$0xff pattern:$0x75316420]
      %v981 = vld.sshfl [vmem:[#allocation1 + $0x10] sm:$0xff pattern:$0x75316420]
      %982 = vrot.lane.b32.xlu0 %v979, 90
      %v983 = vpop.permute.xlu0 %982
      %984 = vrot.lane.b32.xlu0 %v980, 90
      %v985 = vpop.permute.xlu0 %984
      %986 = vrot.lane.b32.xlu0 %v981, 90
      %v987 = vpop.permute.xlu0 %986
      %vm988 = vcmask 736256
      %v989 = vsel %vm988, %v983, %v985
      %v990 = vsel %vm988, %v985, %v987
      %v991 = vsel %vm302, %v975, 0
      %v993 = vsel %vm305, %v989, 0
      %v995 = vsel %vm305, %v990, 0
      %v997 = vsel %vm305, %v987, 0
      %999 = vmatpush.msra.mxu0 0.0
      %1000 = vmatpush.msra.mxu0 0.0
      %1001 = vmatpush.msra.mxu0 0.0
      %1002 = vmatpush.msra.mxu0 0.0
      %1003 = vmatpush.msra.mxu0 0.0
      %1004 = vmatpush.msra.mxu0 0.0
      %1005 = vmatpush.msra.mxu0 0.0
      %1006 = vmatpush.msra.mxu0 0.0
      %1007 = vmatpush.msra.mxu0 0.0
      %1008 = vmatpush.msra.mxu0 0.0
      %1009 = vmatpush.msra.mxu0 0.0
      %1010 = vmatpush.msra.mxu0 0.0
      %1011 = vmatpush.msra.mxu0 0.0
      %1012 = vmatpush.msra.mxu0 0.0
      %1013 = vmatpush.msra.mxu0 0.0
      %1014 = vmatpush.msra.mxu0 %v993
      %1015 = vmatmul.f32.gmra.mxu0 %v991
      %v1016 = vpop.f32.mrf.mxu0
      %v1017 = vadd.f32 0.0, %v1016
      %1018 = vdwg.mxu0
      %1019 = vmatpush.msra.mxu0 0.0
      %1020 = vmatpush.msra.mxu0 0.0
      %1021 = vmatpush.msra.mxu0 0.0
      %1022 = vmatpush.msra.mxu0 0.0
      %1023 = vmatpush.msra.mxu0 0.0
      %1024 = vmatpush.msra.mxu0 0.0
      %1025 = vmatpush.msra.mxu0 0.0
      %1026 = vmatpush.msra.mxu0 0.0
      %1027 = vmatpush.msra.mxu0 0.0
      %1028 = vmatpush.msra.mxu0 0.0
      %1029 = vmatpush.msra.mxu0 0.0
      %1030 = vmatpush.msra.mxu0 0.0
      %1031 = vmatpush.msra.mxu0 0.0
      %1032 = vmatpush.msra.mxu0 0.0
      %1033 = vmatpush.msra.mxu0 0.0
      %1034 = vmatpush.msra.mxu0 %v995
      %1035 = vmatmul.f32.gmra.mxu0 %v991
      %v1036 = vpop.f32.mrf.mxu0
      %v1037 = vadd.f32 0.0, %v1036
      %1038 = vdwg.mxu0
      %1039 = vmatpush.msra.mxu0 0.0
      %1040 = vmatpush.msra.mxu0 0.0
      %1041 = vmatpush.msra.mxu0 0.0
      %1042 = vmatpush.msra.mxu0 0.0
      %1043 = vmatpush.msra.mxu0 0.0
      %1044 = vmatpush.msra.mxu0 0.0
      %1045 = vmatpush.msra.mxu0 0.0
      %1046 = vmatpush.msra.mxu0 0.0
      %1047 = vmatpush.msra.mxu0 0.0
      %1048 = vmatpush.msra.mxu0 0.0
      %1049 = vmatpush.msra.mxu0 0.0
      %1050 = vmatpush.msra.mxu0 0.0
      %1051 = vmatpush.msra.mxu0 0.0
      %1052 = vmatpush.msra.mxu0 0.0
      %1053 = vmatpush.msra.mxu0 0.0
      %1054 = vmatpush.msra.mxu0 %v997
      %1055 = vmatmul.f32.gmra.mxu0 %v991
      %v1056 = vpop.f32.mrf.mxu0
      %v1057 = vadd.f32 0.0, %v1056
      %1058 = vdwg.mxu0
      %v1059 = vadd.f32 %v971, %v1017
      %v1060 = vadd.f32 %v972, %v1037
      %v1061 = vadd.f32 %v973, %v1057
      %v1062 = vld [vmem:[%s2] sm:$0xff]
      %1064 = vset.pattern.permute.xlu0 0
      %1065 = vperm.xlu0 %1064, %v1062
      %v1066 = vpop.permute.xlu0 %1065
      %v1068 = vmul.f32 %v1059, %v1066
      %v1069 = vmul.f32 %v1060, %v1066
      %v1070 = vmul.f32 %v1061, %v1066
      %v1071 = vld [vmem:[%s3] sm:$0xff]
      %1073 = vset.pattern.permute.xlu0 0
      %1074 = vperm.xlu0 %1073, %v1071
      %v1075 = vpop.permute.xlu0 %1074
      %v1077 = vadd.f32 %v1068, %v1075
      %v1078 = vadd.f32 %v1069, %v1075
      %v1079 = vadd.f32 %v1070, %v1075
      %v1080 = vmax.f32 %v1077, 0.0
      %v1081 = vmax.f32 %v1078, 0.0
      %v1082 = vmax.f32 %v1079, 0.0
      %1083 = vst [vmem:[#allocation2] sm:$0xff] 0.0
      %1084 = vst [vmem:[#allocation2 + $0x8] sm:$0xff] 0.0
      %vm1085 = vcmask 703488
      %1086 = vst.msk [vmem:[#allocation2 + $0x10] sm:$0xff] %vm1085, 0.0
      %1088 = vrot.lane.b32.xlu0 %v1080, 19
      %v1089 = vpop.permute.xlu0 %1088
      %vm1091 = vcmask 285848
      %1092 = vst.msk [vmem:[#allocation2] sm:$0xff] %vm1091, %v1089
      %vm1093 = vcmask 433448
      %1094 = vst.msk [vmem:[#allocation2] sm:$0xff] %vm1093, %v1089
      %vm1095 = vcmask 581048
      %1096 = vst.msk [vmem:[#allocation2] sm:$0xff] %vm1095, %v1089
      %vm1097 = vcmask 728648
      %1098 = vst.msk [vmem:[#allocation2] sm:$0xff] %vm1097, %v1089
      %vm1099 = vcmask 876248
      %1100 = vst.msk [vmem:[#allocation2] sm:$0xff] %vm1099, %v1089
      %vm1101 = vcmask 1023848
      %1102 = vst.msk [vmem:[#allocation2] sm:$0xff] %vm1101, %v1089
      %vm1103 = vcmask 1048568
      %1104 = vst.msk [vmem:[#allocation2] sm:$0xff] %vm1103, %v1089
      %vm1105 = vcmask 121856
      %1106 = vst.msk [vmem:[#allocation2 + $0x8] sm:$0xff] %vm1105, %v1089
      %1108 = vrot.lane.b32.xlu0 %v1081, 19
      %v1109 = vpop.permute.xlu0 %1108
      %vm1110 = vcmask 154624
      %v1111 = vsel %vm1110, %v1089, %v1109
      %vm1113 = vcmask 269448
      %1114 = vst.msk [vmem:[#allocation2 + $0x8] sm:$0xff] %vm1113, %v1111
      %vm1116 = vcmask 417048
      %1117 = vst.msk [vmem:[#allocation2 + $0x8] sm:$0xff] %vm1116, %v1109
      %vm1118 = vcmask 564648
      %1119 = vst.msk [vmem:[#allocation2 + $0x8] sm:$0xff] %vm1118, %v1109
      %vm1120 = vcmask 712248
      %1121 = vst.msk [vmem:[#allocation2 + $0x8] sm:$0xff] %vm1120, %v1109
      %vm1122 = vcmask 859848
      %1123 = vst.msk [vmem:[#allocation2 + $0x8] sm:$0xff] %vm1122, %v1109
      %vm1124 = vcmask 1007448
      %1125 = vst.msk [vmem:[#allocation2 + $0x8] sm:$0xff] %vm1124, %v1109
      %vm1126 = vcmask 1048552
      %1127 = vst.msk [vmem:[#allocation2 + $0x8] sm:$0xff] %vm1126, %v1109
      %vm1128 = vcmask 105472
      %1129 = vst.msk [vmem:[#allocation2 + $0x10] sm:$0xff] %vm1128, %v1109
      %1131 = vrot.lane.b32.xlu0 %v1082, 19
      %v1132 = vpop.permute.xlu0 %1131
      %v1133 = vsel %vm1110, %v1109, %v1132
      %vm1135 = vcmask 253048
      %1136 = vst.msk [vmem:[#allocation2 + $0x10] sm:$0xff] %vm1135, %v1133
      %vm1138 = vcmask 400648
      %1139 = vst.msk [vmem:[#allocation2 + $0x10] sm:$0xff] %vm1138, %v1132
      %v1140 = vld [vmem:[#allocation2] sm:$0xff]
      %v1141 = vld [vmem:[#allocation2 + $0x8] sm:$0xff]
      %v1142 = vld [vmem:[#allocation2 + $0x10] sm:$0xff]
      %v1143 = vld [vmem:[%s4] sm:$0xff]
      %1145 = vrot.lane.b32.xlu0 %v1143, 120
      %v1146 = vpop.permute.xlu0 %1145
      %1150 = vrot.lane.b32.xlu0 %v1140, 127
      %v1151 = vpop.permute.xlu0 %1150
      %1152 = vrot.lane.b32.xlu0 %v1141, 127
      %v1153 = vpop.permute.xlu0 %1152
      %1154 = vrot.lane.b32.xlu0 %v1142, 127
      %v1155 = vpop.permute.xlu0 %1154
      %v1156 = vsel %vm299, %v1151, %v1153
      %v1157 = vsel %vm299, %v1153, %v1155
      %vm1161 = vcmask 64512
      %v1162 = vsel %vm1161, %v1146, 0
      %1164 = vmatpush.msra.mxu0 0.0
      %1165 = vmatpush.msra.mxu0 0.0
      %1166 = vmatpush.msra.mxu0 0.0
      %1167 = vmatpush.msra.mxu0 0.0
      %1168 = vmatpush.msra.mxu0 0.0
      %1169 = vmatpush.msra.mxu0 0.0
      %1170 = vmatpush.msra.mxu0 0.0
      %1171 = vmatpush.msra.mxu0 0.0
      %1172 = vmatpush.msra.mxu0 0.0
      %1173 = vmatpush.msra.mxu0 0.0
      %1174 = vmatpush.msra.mxu0 0.0
      %1175 = vmatpush.msra.mxu0 0.0
      %1176 = vmatpush.msra.mxu0 0.0
      %1177 = vmatpush.msra.mxu0 0.0
      %1178 = vmatpush.msra.mxu0 0.0
      %1179 = vmatpush.msra.mxu0 %v1156
      %1180 = vmatmul.f32.gmra.mxu0 %v1162
      %v1181 = vpop.f32.mrf.mxu0
      %v1182 = vadd.f32 0.0, %v1181
      %1183 = vdwg.mxu0
      %1184 = vmatpush.msra.mxu0 0.0
      %1185 = vmatpush.msra.mxu0 0.0
      %1186 = vmatpush.msra.mxu0 0.0
      %1187 = vmatpush.msra.mxu0 0.0
      %1188 = vmatpush.msra.mxu0 0.0
      %1189 = vmatpush.msra.mxu0 0.0
      %1190 = vmatpush.msra.mxu0 0.0
      %1191 = vmatpush.msra.mxu0 0.0
      %1192 = vmatpush.msra.mxu0 0.0
      %1193 = vmatpush.msra.mxu0 0.0
      %1194 = vmatpush.msra.mxu0 0.0
      %1195 = vmatpush.msra.mxu0 0.0
      %1196 = vmatpush.msra.mxu0 0.0
      %1197 = vmatpush.msra.mxu0 0.0
      %1198 = vmatpush.msra.mxu0 0.0
      %1199 = vmatpush.msra.mxu0 %v1157
      %1200 = vmatmul.f32.gmra.mxu0 %v1162
      %v1201 = vpop.f32.mrf.mxu0
      %v1202 = vadd.f32 0.0, %v1201
      %1203 = vdwg.mxu0
      %1204 = vmatpush.msra.mxu0 0.0
      %1205 = vmatpush.msra.mxu0 0.0
      %1206 = vmatpush.msra.mxu0 0.0
      %1207 = vmatpush.msra.mxu0 0.0
      %1208 = vmatpush.msra.mxu0 0.0
      %1209 = vmatpush.msra.mxu0 0.0
      %1210 = vmatpush.msra.mxu0 0.0
      %1211 = vmatpush.msra.mxu0 0.0
      %1212 = vmatpush.msra.mxu0 0.0
      %1213 = vmatpush.msra.mxu0 0.0
      %1214 = vmatpush.msra.mxu0 0.0
      %1215 = vmatpush.msra.mxu0 0.0
      %1216 = vmatpush.msra.mxu0 0.0
      %1217 = vmatpush.msra.mxu0 0.0
      %1218 = vmatpush.msra.mxu0 0.0
      %1219 = vmatpush.msra.mxu0 %v1155
      %1220 = vmatmul.f32.gmra.mxu0 %v1162
      %v1221 = vpop.f32.mrf.mxu0
      %v1222 = vadd.f32 0.0, %v1221
      %1223 = vdwg.mxu0
      %v1224 = vsel %vm1161, %v1143, 0
      %1226 = vmatpush.msra.mxu0 0.0
      %1227 = vmatpush.msra.mxu0 0.0
      %1228 = vmatpush.msra.mxu0 0.0
      %1229 = vmatpush.msra.mxu0 0.0
      %1230 = vmatpush.msra.mxu0 0.0
      %1231 = vmatpush.msra.mxu0 0.0
      %1232 = vmatpush.msra.mxu0 0.0
      %1233 = vmatpush.msra.mxu0 0.0
      %1234 = vmatpush.msra.mxu0 0.0
      %1235 = vmatpush.msra.mxu0 0.0
      %1236 = vmatpush.msra.mxu0 0.0
      %1237 = vmatpush.msra.mxu0 0.0
      %1238 = vmatpush.msra.mxu0 0.0
      %1239 = vmatpush.msra.mxu0 0.0
      %1240 = vmatpush.msra.mxu0 0.0
      %1241 = vmatpush.msra.mxu0 %v1140
      %1242 = vmatmul.f32.gmra.mxu0 %v1224
      %v1243 = vpop.f32.mrf.mxu0
      %v1244 = vadd.f32 %v1182, %v1243
      %1245 = vdwg.mxu0
      %1246 = vmatpush.msra.mxu0 0.0
      %1247 = vmatpush.msra.mxu0 0.0
      %1248 = vmatpush.msra.mxu0 0.0
      %1249 = vmatpush.msra.mxu0 0.0
      %1250 = vmatpush.msra.mxu0 0.0
      %1251 = vmatpush.msra.mxu0 0.0
      %1252 = vmatpush.msra.mxu0 0.0
      %1253 = vmatpush.msra.mxu0 0.0
      %1254 = vmatpush.msra.mxu0 0.0
      %1255 = vmatpush.msra.mxu0 0.0
      %1256 = vmatpush.msra.mxu0 0.0
      %1257 = vmatpush.msra.mxu0 0.0
      %1258 = vmatpush.msra.mxu0 0.0
      %1259 = vmatpush.msra.mxu0 0.0
      %1260 = vmatpush.msra.mxu0 0.0
      %1261 = vmatpush.msra.mxu0 %v1141
      %1262 = vmatmul.f32.gmra.mxu0 %v1224
      %v1263 = vpop.f32.mrf.mxu0
      %v1264 = vadd.f32 %v1202, %v1263
      %1265 = vdwg.mxu0
      %1266 = vmatpush.msra.mxu0 0.0
      %1267 = vmatpush.msra.mxu0 0.0
      %1268 = vmatpush.msra.mxu0 0.0
      %1269 = vmatpush.msra.mxu0 0.0
      %1270 = vmatpush.msra.mxu0 0.0
      %1271 = vmatpush.msra.mxu0 0.0
      %1272 = vmatpush.msra.mxu0 0.0
      %1273 = vmatpush.msra.mxu0 0.0
      %1274 = vmatpush.msra.mxu0 0.0
      %1275 = vmatpush.msra.mxu0 0.0
      %1276 = vmatpush.msra.mxu0 0.0
      %1277 = vmatpush.msra.mxu0 0.0
      %1278 = vmatpush.msra.mxu0 0.0
      %1279 = vmatpush.msra.mxu0 0.0
      %1280 = vmatpush.msra.mxu0 0.0
      %1281 = vmatpush.msra.mxu0 %v1142
      %1282 = vmatmul.f32.gmra.mxu0 %v1224
      %v1283 = vpop.f32.mrf.mxu0
      %v1284 = vadd.f32 %v1222, %v1283
      %1285 = vdwg.mxu0
      %1286 = vrot.lane.b32.xlu0 %v1143, 112
      %v1287 = vpop.permute.xlu0 %1286
      %1288 = vrot.lane.b32.xlu0 %v1140, 126
      %v1289 = vpop.permute.xlu0 %1288
      %1290 = vrot.lane.b32.xlu0 %v1141, 126
      %v1291 = vpop.permute.xlu0 %1290
      %1292 = vrot.lane.b32.xlu0 %v1142, 126
      %v1293 = vpop.permute.xlu0 %1292
      %v1294 = vsel %vm460, %v1289, %v1291
      %v1295 = vsel %vm460, %v1291, %v1293
      %v1299 = vsel %vm1161, %v1287, 0
      %1301 = vmatpush.msra.mxu0 0.0
      %1302 = vmatpush.msra.mxu0 0.0
      %1303 = vmatpush.msra.mxu0 0.0
      %1304 = vmatpush.msra.mxu0 0.0
      %1305 = vmatpush.msra.mxu0 0.0
      %1306 = vmatpush.msra.mxu0 0.0
      %1307 = vmatpush.msra.mxu0 0.0
      %1308 = vmatpush.msra.mxu0 0.0
      %1309 = vmatpush.msra.mxu0 0.0
      %1310 = vmatpush.msra.mxu0 0.0
      %1311 = vmatpush.msra.mxu0 0.0
      %1312 = vmatpush.msra.mxu0 0.0
      %1313 = vmatpush.msra.mxu0 0.0
      %1314 = vmatpush.msra.mxu0 0.0
      %1315 = vmatpush.msra.mxu0 0.0
      %1316 = vmatpush.msra.mxu0 %v1294
      %1317 = vmatmul.f32.gmra.mxu0 %v1299
      %v1318 = vpop.f32.mrf.mxu0
      %v1319 = vadd.f32 0.0, %v1318
      %1320 = vdwg.mxu0
      %1321 = vmatpush.msra.mxu0 0.0
      %1322 = vmatpush.msra.mxu0 0.0
      %1323 = vmatpush.msra.mxu0 0.0
      %1324 = vmatpush.msra.mxu0 0.0
      %1325 = vmatpush.msra.mxu0 0.0
      %1326 = vmatpush.msra.mxu0 0.0
      %1327 = vmatpush.msra.mxu0 0.0
      %1328 = vmatpush.msra.mxu0 0.0
      %1329 = vmatpush.msra.mxu0 0.0
      %1330 = vmatpush.msra.mxu0 0.0
      %1331 = vmatpush.msra.mxu0 0.0
      %1332 = vmatpush.msra.mxu0 0.0
      %1333 = vmatpush.msra.mxu0 0.0
      %1334 = vmatpush.msra.mxu0 0.0
      %1335 = vmatpush.msra.mxu0 0.0
      %1336 = vmatpush.msra.mxu0 %v1295
      %1337 = vmatmul.f32.gmra.mxu0 %v1299
      %v1338 = vpop.f32.mrf.mxu0
      %v1339 = vadd.f32 0.0, %v1338
      %1340 = vdwg.mxu0
      %1341 = vmatpush.msra.mxu0 0.0
      %1342 = vmatpush.msra.mxu0 0.0
      %1343 = vmatpush.msra.mxu0 0.0
      %1344 = vmatpush.msra.mxu0 0.0
      %1345 = vmatpush.msra.mxu0 0.0
      %1346 = vmatpush.msra.mxu0 0.0
      %1347 = vmatpush.msra.mxu0 0.0
      %1348 = vmatpush.msra.mxu0 0.0
      %1349 = vmatpush.msra.mxu0 0.0
      %1350 = vmatpush.msra.mxu0 0.0
      %1351 = vmatpush.msra.mxu0 0.0
      %1352 = vmatpush.msra.mxu0 0.0
      %1353 = vmatpush.msra.mxu0 0.0
      %1354 = vmatpush.msra.mxu0 0.0
      %1355 = vmatpush.msra.mxu0 0.0
      %1356 = vmatpush.msra.mxu0 %v1293
      %1357 = vmatmul.f32.gmra.mxu0 %v1299
      %v1358 = vpop.f32.mrf.mxu0
      %v1359 = vadd.f32 0.0, %v1358
      %1360 = vdwg.mxu0
      %v1361 = vadd.f32 %v1244, %v1319
      %v1362 = vadd.f32 %v1264, %v1339
      %v1363 = vadd.f32 %v1284, %v1359
      %1364 = vrot.lane.b32.xlu0 %v1143, 104
      %v1365 = vpop.permute.xlu0 %1364
      %1366 = vrot.lane.b32.xlu0 %v1140, 110
      %v1367 = vpop.permute.xlu0 %1366
      %1368 = vrot.lane.b32.xlu0 %v1141, 110
      %v1369 = vpop.permute.xlu0 %1368
      %1370 = vrot.lane.b32.xlu0 %v1142, 110
      %v1371 = vpop.permute.xlu0 %1370
      %v1372 = vsel %vm548, %v1367, %v1369
      %v1373 = vsel %vm548, %v1369, %v1371
      %v1377 = vsel %vm1161, %v1365, 0
      %1379 = vmatpush.msra.mxu0 0.0
      %1380 = vmatpush.msra.mxu0 0.0
      %1381 = vmatpush.msra.mxu0 0.0
      %1382 = vmatpush.msra.mxu0 0.0
      %1383 = vmatpush.msra.mxu0 0.0
      %1384 = vmatpush.msra.mxu0 0.0
      %1385 = vmatpush.msra.mxu0 0.0
      %1386 = vmatpush.msra.mxu0 0.0
      %1387 = vmatpush.msra.mxu0 0.0
      %1388 = vmatpush.msra.mxu0 0.0
      %1389 = vmatpush.msra.mxu0 0.0
      %1390 = vmatpush.msra.mxu0 0.0
      %1391 = vmatpush.msra.mxu0 0.0
      %1392 = vmatpush.msra.mxu0 0.0
      %1393 = vmatpush.msra.mxu0 0.0
      %1394 = vmatpush.msra.mxu0 %v1372
      %1395 = vmatmul.f32.gmra.mxu0 %v1377
      %v1396 = vpop.f32.mrf.mxu0
      %v1397 = vadd.f32 0.0, %v1396
      %1398 = vdwg.mxu0
      %1399 = vmatpush.msra.mxu0 0.0
      %1400 = vmatpush.msra.mxu0 0.0
      %1401 = vmatpush.msra.mxu0 0.0
      %1402 = vmatpush.msra.mxu0 0.0
      %1403 = vmatpush.msra.mxu0 0.0
      %1404 = vmatpush.msra.mxu0 0.0
      %1405 = vmatpush.msra.mxu0 0.0
      %1406 = vmatpush.msra.mxu0 0.0
      %1407 = vmatpush.msra.mxu0 0.0
      %1408 = vmatpush.msra.mxu0 0.0
      %1409 = vmatpush.msra.mxu0 0.0
      %1410 = vmatpush.msra.mxu0 0.0
      %1411 = vmatpush.msra.mxu0 0.0
      %1412 = vmatpush.msra.mxu0 0.0
      %1413 = vmatpush.msra.mxu0 0.0
      %1414 = vmatpush.msra.mxu0 %v1373
      %1415 = vmatmul.f32.gmra.mxu0 %v1377
      %v1416 = vpop.f32.mrf.mxu0
      %v1417 = vadd.f32 0.0, %v1416
      %1418 = vdwg.mxu0
      %1419 = vmatpush.msra.mxu0 0.0
      %1420 = vmatpush.msra.mxu0 0.0
      %1421 = vmatpush.msra.mxu0 0.0
      %1422 = vmatpush.msra.mxu0 0.0
      %1423 = vmatpush.msra.mxu0 0.0
      %1424 = vmatpush.msra.mxu0 0.0
      %1425 = vmatpush.msra.mxu0 0.0
      %1426 = vmatpush.msra.mxu0 0.0
      %1427 = vmatpush.msra.mxu0 0.0
      %1428 = vmatpush.msra.mxu0 0.0
      %1429 = vmatpush.msra.mxu0 0.0
      %1430 = vmatpush.msra.mxu0 0.0
      %1431 = vmatpush.msra.mxu0 0.0
      %1432 = vmatpush.msra.mxu0 0.0
      %1433 = vmatpush.msra.mxu0 0.0
      %1434 = vmatpush.msra.mxu0 %v1371
      %1435 = vmatmul.f32.gmra.mxu0 %v1377
      %v1436 = vpop.f32.mrf.mxu0
      %v1437 = vadd.f32 0.0, %v1436
      %1438 = vdwg.mxu0
      %v1439 = vadd.f32 %v1361, %v1397
      %v1440 = vadd.f32 %v1362, %v1417
      %v1441 = vadd.f32 %v1363, %v1437
      %1442 = vrot.lane.b32.xlu0 %v1143, 96
      %v1443 = vpop.permute.xlu0 %1442
      %1444 = vrot.lane.b32.xlu0 %v1140, 109
      %v1445 = vpop.permute.xlu0 %1444
      %1446 = vrot.lane.b32.xlu0 %v1141, 109
      %v1447 = vpop.permute.xlu0 %1446
      %1448 = vrot.lane.b32.xlu0 %v1142, 109
      %v1449 = vpop.permute.xlu0 %1448
      %v1450 = vsel %vm636, %v1445, %v1447
      %v1451 = vsel %vm636, %v1447, %v1449
      %v1455 = vsel %vm1161, %v1443, 0
      %1457 = vmatpush.msra.mxu0 0.0
      %1458 = vmatpush.msra.mxu0 0.0
      %1459 = vmatpush.msra.mxu0 0.0
      %1460 = vmatpush.msra.mxu0 0.0
      %1461 = vmatpush.msra.mxu0 0.0
      %1462 = vmatpush.msra.mxu0 0.0
      %1463 = vmatpush.msra.mxu0 0.0
      %1464 = vmatpush.msra.mxu0 0.0
      %1465 = vmatpush.msra.mxu0 0.0
      %1466 = vmatpush.msra.mxu0 0.0
      %1467 = vmatpush.msra.mxu0 0.0
      %1468 = vmatpush.msra.mxu0 0.0
      %1469 = vmatpush.msra.mxu0 0.0
      %1470 = vmatpush.msra.mxu0 0.0
      %1471 = vmatpush.msra.mxu0 0.0
      %1472 = vmatpush.msra.mxu0 %v1450
      %1473 = vmatmul.f32.gmra.mxu0 %v1455
      %v1474 = vpop.f32.mrf.mxu0
      %v1475 = vadd.f32 0.0, %v1474
      %1476 = vdwg.mxu0
      %1477 = vmatpush.msra.mxu0 0.0
      %1478 = vmatpush.msra.mxu0 0.0
      %1479 = vmatpush.msra.mxu0 0.0
      %1480 = vmatpush.msra.mxu0 0.0
      %1481 = vmatpush.msra.mxu0 0.0
      %1482 = vmatpush.msra.mxu0 0.0
      %1483 = vmatpush.msra.mxu0 0.0
      %1484 = vmatpush.msra.mxu0 0.0
      %1485 = vmatpush.msra.mxu0 0.0
      %1486 = vmatpush.msra.mxu0 0.0
      %1487 = vmatpush.msra.mxu0 0.0
      %1488 = vmatpush.msra.mxu0 0.0
      %1489 = vmatpush.msra.mxu0 0.0
      %1490 = vmatpush.msra.mxu0 0.0
      %1491 = vmatpush.msra.mxu0 0.0
      %1492 = vmatpush.msra.mxu0 %v1451
      %1493 = vmatmul.f32.gmra.mxu0 %v1455
      %v1494 = vpop.f32.mrf.mxu0
      %v1495 = vadd.f32 0.0, %v1494
      %1496 = vdwg.mxu0
      %1497 = vmatpush.msra.mxu0 0.0
      %1498 = vmatpush.msra.mxu0 0.0
      %1499 = vmatpush.msra.mxu0 0.0
      %1500 = vmatpush.msra.mxu0 0.0
      %1501 = vmatpush.msra.mxu0 0.0
      %1502 = vmatpush.msra.mxu0 0.0
      %1503 = vmatpush.msra.mxu0 0.0
      %1504 = vmatpush.msra.mxu0 0.0
      %1505 = vmatpush.msra.mxu0 0.0
      %1506 = vmatpush.msra.mxu0 0.0
      %1507 = vmatpush.msra.mxu0 0.0
      %1508 = vmatpush.msra.mxu0 0.0
      %1509 = vmatpush.msra.mxu0 0.0
      %1510 = vmatpush.msra.mxu0 0.0
      %1511 = vmatpush.msra.mxu0 0.0
      %1512 = vmatpush.msra.mxu0 %v1449
      %1513 = vmatmul.f32.gmra.mxu0 %v1455
      %v1514 = vpop.f32.mrf.mxu0
      %v1515 = vadd.f32 0.0, %v1514
      %1516 = vdwg.mxu0
      %v1517 = vadd.f32 %v1439, %v1475
      %v1518 = vadd.f32 %v1440, %v1495
      %v1519 = vadd.f32 %v1441, %v1515
      %1520 = vrot.lane.b32.xlu0 %v1143, 88
      %v1521 = vpop.permute.xlu0 %1520
      %1522 = vrot.lane.b32.xlu0 %v1140, 108
      %v1523 = vpop.permute.xlu0 %1522
      %1524 = vrot.lane.b32.xlu0 %v1141, 108
      %v1525 = vpop.permute.xlu0 %1524
      %1526 = vrot.lane.b32.xlu0 %v1142, 108
      %v1527 = vpop.permute.xlu0 %1526
      %v1528 = vsel %vm724, %v1523, %v1525
      %v1529 = vsel %vm724, %v1525, %v1527
      %v1533 = vsel %vm1161, %v1521, 0
      %1535 = vmatpush.msra.mxu0 0.0
      %1536 = vmatpush.msra.mxu0 0.0
      %1537 = vmatpush.msra.mxu0 0.0
      %1538 = vmatpush.msra.mxu0 0.0
      %1539 = vmatpush.msra.mxu0 0.0
      %1540 = vmatpush.msra.mxu0 0.0
      %1541 = vmatpush.msra.mxu0 0.0
      %1542 = vmatpush.msra.mxu0 0.0
      %1543 = vmatpush.msra.mxu0 0.0
      %1544 = vmatpush.msra.mxu0 0.0
      %1545 = vmatpush.msra.mxu0 0.0
      %1546 = vmatpush.msra.mxu0 0.0
      %1547 = vmatpush.msra.mxu0 0.0
      %1548 = vmatpush.msra.mxu0 0.0
      %1549 = vmatpush.msra.mxu0 0.0
      %1550 = vmatpush.msra.mxu0 %v1528
      %1551 = vmatmul.f32.gmra.mxu0 %v1533
      %v1552 = vpop.f32.mrf.mxu0
      %v1553 = vadd.f32 0.0, %v1552
      %1554 = vdwg.mxu0
      %1555 = vmatpush.msra.mxu0 0.0
      %1556 = vmatpush.msra.mxu0 0.0
      %1557 = vmatpush.msra.mxu0 0.0
      %1558 = vmatpush.msra.mxu0 0.0
      %1559 = vmatpush.msra.mxu0 0.0
      %1560 = vmatpush.msra.mxu0 0.0
      %1561 = vmatpush.msra.mxu0 0.0
      %1562 = vmatpush.msra.mxu0 0.0
      %1563 = vmatpush.msra.mxu0 0.0
      %1564 = vmatpush.msra.mxu0 0.0
      %1565 = vmatpush.msra.mxu0 0.0
      %1566 = vmatpush.msra.mxu0 0.0
      %1567 = vmatpush.msra.mxu0 0.0
      %1568 = vmatpush.msra.mxu0 0.0
      %1569 = vmatpush.msra.mxu0 0.0
      %1570 = vmatpush.msra.mxu0 %v1529
      %1571 = vmatmul.f32.gmra.mxu0 %v1533
      %v1572 = vpop.f32.mrf.mxu0
      %v1573 = vadd.f32 0.0, %v1572
      %1574 = vdwg.mxu0
      %1575 = vmatpush.msra.mxu0 0.0
      %1576 = vmatpush.msra.mxu0 0.0
      %1577 = vmatpush.msra.mxu0 0.0
      %1578 = vmatpush.msra.mxu0 0.0
      %1579 = vmatpush.msra.mxu0 0.0
      %1580 = vmatpush.msra.mxu0 0.0
      %1581 = vmatpush.msra.mxu0 0.0
      %1582 = vmatpush.msra.mxu0 0.0
      %1583 = vmatpush.msra.mxu0 0.0
      %1584 = vmatpush.msra.mxu0 0.0
      %1585 = vmatpush.msra.mxu0 0.0
      %1586 = vmatpush.msra.mxu0 0.0
      %1587 = vmatpush.msra.mxu0 0.0
      %1588 = vmatpush.msra.mxu0 0.0
      %1589 = vmatpush.msra.mxu0 0.0
      %1590 = vmatpush.msra.mxu0 %v1527
      %1591 = vmatmul.f32.gmra.mxu0 %v1533
      %v1592 = vpop.f32.mrf.mxu0
      %v1593 = vadd.f32 0.0, %v1592
      %1594 = vdwg.mxu0
      %v1595 = vadd.f32 %v1517, %v1553
      %v1596 = vadd.f32 %v1518, %v1573
      %v1597 = vadd.f32 %v1519, %v1593
      %1598 = vrot.lane.b32.xlu0 %v1143, 80
      %v1599 = vpop.permute.xlu0 %1598
      %1600 = vrot.lane.b32.xlu0 %v1140, 92
      %v1601 = vpop.permute.xlu0 %1600
      %1602 = vrot.lane.b32.xlu0 %v1141, 92
      %v1603 = vpop.permute.xlu0 %1602
      %1604 = vrot.lane.b32.xlu0 %v1142, 92
      %v1605 = vpop.permute.xlu0 %1604
      %v1606 = vsel %vm812, %v1601, %v1603
      %v1607 = vsel %vm812, %v1603, %v1605
      %v1611 = vsel %vm1161, %v1599, 0
      %1613 = vmatpush.msra.mxu0 0.0
      %1614 = vmatpush.msra.mxu0 0.0
      %1615 = vmatpush.msra.mxu0 0.0
      %1616 = vmatpush.msra.mxu0 0.0
      %1617 = vmatpush.msra.mxu0 0.0
      %1618 = vmatpush.msra.mxu0 0.0
      %1619 = vmatpush.msra.mxu0 0.0
      %1620 = vmatpush.msra.mxu0 0.0
      %1621 = vmatpush.msra.mxu0 0.0
      %1622 = vmatpush.msra.mxu0 0.0
      %1623 = vmatpush.msra.mxu0 0.0
      %1624 = vmatpush.msra.mxu0 0.0
      %1625 = vmatpush.msra.mxu0 0.0
      %1626 = vmatpush.msra.mxu0 0.0
      %1627 = vmatpush.msra.mxu0 0.0
      %1628 = vmatpush.msra.mxu0 %v1606
      %1629 = vmatmul.f32.gmra.mxu0 %v1611
      %v1630 = vpop.f32.mrf.mxu0
      %v1631 = vadd.f32 0.0, %v1630
      %1632 = vdwg.mxu0
      %1633 = vmatpush.msra.mxu0 0.0
      %1634 = vmatpush.msra.mxu0 0.0
      %1635 = vmatpush.msra.mxu0 0.0
      %1636 = vmatpush.msra.mxu0 0.0
      %1637 = vmatpush.msra.mxu0 0.0
      %1638 = vmatpush.msra.mxu0 0.0
      %1639 = vmatpush.msra.mxu0 0.0
      %1640 = vmatpush.msra.mxu0 0.0
      %1641 = vmatpush.msra.mxu0 0.0
      %1642 = vmatpush.msra.mxu0 0.0
      %1643 = vmatpush.msra.mxu0 0.0
      %1644 = vmatpush.msra.mxu0 0.0
      %1645 = vmatpush.msra.mxu0 0.0
      %1646 = vmatpush.msra.mxu0 0.0
      %1647 = vmatpush.msra.mxu0 0.0
      %1648 = vmatpush.msra.mxu0 %v1607
      %1649 = vmatmul.f32.gmra.mxu0 %v1611
      %v1650 = vpop.f32.mrf.mxu0
      %v1651 = vadd.f32 0.0, %v1650
      %1652 = vdwg.mxu0
      %1653 = vmatpush.msra.mxu0 0.0
      %1654 = vmatpush.msra.mxu0 0.0
      %1655 = vmatpush.msra.mxu0 0.0
      %1656 = vmatpush.msra.mxu0 0.0
      %1657 = vmatpush.msra.mxu0 0.0
      %1658 = vmatpush.msra.mxu0 0.0
      %1659 = vmatpush.msra.mxu0 0.0
      %1660 = vmatpush.msra.mxu0 0.0
      %1661 = vmatpush.msra.mxu0 0.0
      %1662 = vmatpush.msra.mxu0 0.0
      %1663 = vmatpush.msra.mxu0 0.0
      %1664 = vmatpush.msra.mxu0 0.0
      %1665 = vmatpush.msra.mxu0 0.0
      %1666 = vmatpush.msra.mxu0 0.0
      %1667 = vmatpush.msra.mxu0 0.0
      %1668 = vmatpush.msra.mxu0 %v1605
      %1669 = vmatmul.f32.gmra.mxu0 %v1611
      %v1670 = vpop.f32.mrf.mxu0
      %v1671 = vadd.f32 0.0, %v1670
      %1672 = vdwg.mxu0
      %v1673 = vadd.f32 %v1595, %v1631
      %v1674 = vadd.f32 %v1596, %v1651
      %v1675 = vadd.f32 %v1597, %v1671
      %1676 = vrot.lane.b32.xlu0 %v1143, 72
      %v1677 = vpop.permute.xlu0 %1676
      %1678 = vrot.lane.b32.xlu0 %v1140, 91
      %v1679 = vpop.permute.xlu0 %1678
      %1680 = vrot.lane.b32.xlu0 %v1141, 91
      %v1681 = vpop.permute.xlu0 %1680
      %1682 = vrot.lane.b32.xlu0 %v1142, 91
      %v1683 = vpop.permute.xlu0 %1682
      %v1684 = vsel %vm900, %v1679, %v1681
      %v1685 = vsel %vm900, %v1681, %v1683
      %v1689 = vsel %vm1161, %v1677, 0
      %1691 = vmatpush.msra.mxu0 0.0
      %1692 = vmatpush.msra.mxu0 0.0
      %1693 = vmatpush.msra.mxu0 0.0
      %1694 = vmatpush.msra.mxu0 0.0
      %1695 = vmatpush.msra.mxu0 0.0
      %1696 = vmatpush.msra.mxu0 0.0
      %1697 = vmatpush.msra.mxu0 0.0
      %1698 = vmatpush.msra.mxu0 0.0
      %1699 = vmatpush.msra.mxu0 0.0
      %1700 = vmatpush.msra.mxu0 0.0
      %1701 = vmatpush.msra.mxu0 0.0
      %1702 = vmatpush.msra.mxu0 0.0
      %1703 = vmatpush.msra.mxu0 0.0
      %1704 = vmatpush.msra.mxu0 0.0
      %1705 = vmatpush.msra.mxu0 0.0
      %1706 = vmatpush.msra.mxu0 %v1684
      %1707 = vmatmul.f32.gmra.mxu0 %v1689
      %v1708 = vpop.f32.mrf.mxu0
      %v1709 = vadd.f32 0.0, %v1708
      %1710 = vdwg.mxu0
      %1711 = vmatpush.msra.mxu0 0.0
      %1712 = vmatpush.msra.mxu0 0.0
      %1713 = vmatpush.msra.mxu0 0.0
      %1714 = vmatpush.msra.mxu0 0.0
      %1715 = vmatpush.msra.mxu0 0.0
      %1716 = vmatpush.msra.mxu0 0.0
      %1717 = vmatpush.msra.mxu0 0.0
      %1718 = vmatpush.msra.mxu0 0.0
      %1719 = vmatpush.msra.mxu0 0.0
      %1720 = vmatpush.msra.mxu0 0.0
      %1721 = vmatpush.msra.mxu0 0.0
      %1722 = vmatpush.msra.mxu0 0.0
      %1723 = vmatpush.msra.mxu0 0.0
      %1724 = vmatpush.msra.mxu0 0.0
      %1725 = vmatpush.msra.mxu0 0.0
      %1726 = vmatpush.msra.mxu0 %v1685
      %1727 = vmatmul.f32.gmra.mxu0 %v1689
      %v1728 = vpop.f32.mrf.mxu0
      %v1729 = vadd.f32 0.0, %v1728
      %1730 = vdwg.mxu0
      %1731 = vmatpush.msra.mxu0 0.0
      %1732 = vmatpush.msra.mxu0 0.0
      %1733 = vmatpush.msra.mxu0 0.0
      %1734 = vmatpush.msra.mxu0 0.0
      %1735 = vmatpush.msra.mxu0 0.0
      %1736 = vmatpush.msra.mxu0 0.0
      %1737 = vmatpush.msra.mxu0 0.0
      %1738 = vmatpush.msra.mxu0 0.0
      %1739 = vmatpush.msra.mxu0 0.0
      %1740 = vmatpush.msra.mxu0 0.0
      %1741 = vmatpush.msra.mxu0 0.0
      %1742 = vmatpush.msra.mxu0 0.0
      %1743 = vmatpush.msra.mxu0 0.0
      %1744 = vmatpush.msra.mxu0 0.0
      %1745 = vmatpush.msra.mxu0 0.0
      %1746 = vmatpush.msra.mxu0 %v1683
      %1747 = vmatmul.f32.gmra.mxu0 %v1689
      %v1748 = vpop.f32.mrf.mxu0
      %v1749 = vadd.f32 0.0, %v1748
      %1750 = vdwg.mxu0
      %v1751 = vadd.f32 %v1673, %v1709
      %v1752 = vadd.f32 %v1674, %v1729
      %v1753 = vadd.f32 %v1675, %v1749
      %1754 = vrot.lane.b32.xlu0 %v1143, 64
      %v1755 = vpop.permute.xlu0 %1754
      %1756 = vrot.lane.b32.xlu0 %v1140, 90
      %v1757 = vpop.permute.xlu0 %1756
      %1758 = vrot.lane.b32.xlu0 %v1141, 90
      %v1759 = vpop.permute.xlu0 %1758
      %1760 = vrot.lane.b32.xlu0 %v1142, 90
      %v1761 = vpop.permute.xlu0 %1760
      %v1762 = vsel %vm988, %v1757, %v1759
      %v1763 = vsel %vm988, %v1759, %v1761
      %v1767 = vsel %vm1161, %v1755, 0
      %1769 = vmatpush.msra.mxu0 0.0
      %1770 = vmatpush.msra.mxu0 0.0
      %1771 = vmatpush.msra.mxu0 0.0
      %1772 = vmatpush.msra.mxu0 0.0
      %1773 = vmatpush.msra.mxu0 0.0
      %1774 = vmatpush.msra.mxu0 0.0
      %1775 = vmatpush.msra.mxu0 0.0
      %1776 = vmatpush.msra.mxu0 0.0
      %1777 = vmatpush.msra.mxu0 0.0
      %1778 = vmatpush.msra.mxu0 0.0
      %1779 = vmatpush.msra.mxu0 0.0
      %1780 = vmatpush.msra.mxu0 0.0
      %1781 = vmatpush.msra.mxu0 0.0
      %1782 = vmatpush.msra.mxu0 0.0
      %1783 = vmatpush.msra.mxu0 0.0
      %1784 = vmatpush.msra.mxu0 %v1762
      %1785 = vmatmul.f32.gmra.mxu0 %v1767
      %v1786 = vpop.f32.mrf.mxu0
      %v1787 = vadd.f32 0.0, %v1786
      %1788 = vdwg.mxu0
      %1789 = vmatpush.msra.mxu0 0.0
      %1790 = vmatpush.msra.mxu0 0.0
      %1791 = vmatpush.msra.mxu0 0.0
      %1792 = vmatpush.msra.mxu0 0.0
      %1793 = vmatpush.msra.mxu0 0.0
      %1794 = vmatpush.msra.mxu0 0.0
      %1795 = vmatpush.msra.mxu0 0.0
      %1796 = vmatpush.msra.mxu0 0.0
      %1797 = vmatpush.msra.mxu0 0.0
      %1798 = vmatpush.msra.mxu0 0.0
      %1799 = vmatpush.msra.mxu0 0.0
      %1800 = vmatpush.msra.mxu0 0.0
      %1801 = vmatpush.msra.mxu0 0.0
      %1802 = vmatpush.msra.mxu0 0.0
      %1803 = vmatpush.msra.mxu0 0.0
      %1804 = vmatpush.msra.mxu0 %v1763
      %1805 = vmatmul.f32.gmra.mxu0 %v1767
      %v1806 = vpop.f32.mrf.mxu0
      %v1807 = vadd.f32 0.0, %v1806
      %1808 = vdwg.mxu0
      %1809 = vmatpush.msra.mxu0 0.0
      %1810 = vmatpush.msra.mxu0 0.0
      %1811 = vmatpush.msra.mxu0 0.0
      %1812 = vmatpush.msra.mxu0 0.0
      %1813 = vmatpush.msra.mxu0 0.0
      %1814 = vmatpush.msra.mxu0 0.0
      %1815 = vmatpush.msra.mxu0 0.0
      %1816 = vmatpush.msra.mxu0 0.0
      %1817 = vmatpush.msra.mxu0 0.0
      %1818 = vmatpush.msra.mxu0 0.0
      %1819 = vmatpush.msra.mxu0 0.0
      %1820 = vmatpush.msra.mxu0 0.0
      %1821 = vmatpush.msra.mxu0 0.0
      %1822 = vmatpush.msra.mxu0 0.0
      %1823 = vmatpush.msra.mxu0 0.0
      %1824 = vmatpush.msra.mxu0 %v1761
      %1825 = vmatmul.f32.gmra.mxu0 %v1767
      %v1826 = vpop.f32.mrf.mxu0
      %v1827 = vadd.f32 0.0, %v1826
      %1828 = vdwg.mxu0
      %v1829 = vadd.f32 %v1751, %v1787
      %v1830 = vadd.f32 %v1752, %v1807
      %v1831 = vadd.f32 %v1753, %v1827
      %v1832 = vld [vmem:[%s5] sm:$0xff]
      %1834 = vset.pattern.permute.xlu0 0
      %1835 = vperm.xlu0 %1834, %v1832
      %v1836 = vpop.permute.xlu0 %1835
      %v1838 = vmul.f32 %v1829, %v1836
      %v1839 = vmul.f32 %v1830, %v1836
      %v1840 = vmul.f32 %v1831, %v1836
      %v1841 = vld [vmem:[%s6] sm:$0xff]
      %1843 = vset.pattern.permute.xlu0 0
      %1844 = vperm.xlu0 %1843, %v1841
      %v1845 = vpop.permute.xlu0 %1844
      %v1847 = vadd.f32 %v1838, %v1845
      %v1848 = vadd.f32 %v1839, %v1845
      %v1849 = vadd.f32 %v1840, %v1845
      %v1850 = vmax.f32 %v1847, 0.0
      %v1851 = vmax.f32 %v1848, 0.0
      %v1852 = vmax.f32 %v1849, 0.0
      %vm1853 = vcmask 130048
      %1854 = vst.msk [vmem:[%s278] sm:$0xff] %vm1853, %v1850
      %1856 = vrot.lane.b32.xlu0 %v1850, 126
      %v1857 = vpop.permute.xlu0 %1856
      %vm1859 = vcmask 261248
      %1860 = vst.msk [vmem:[%s278] sm:$0xff] %vm1859, %v1857
      %1861 = vrot.lane.b32.xlu0 %v1850, 124
      %v1862 = vpop.permute.xlu0 %1861
      %vm1864 = vcmask 392448
      %1865 = vst.msk [vmem:[%s278] sm:$0xff] %vm1864, %v1862
      %1866 = vrot.lane.b32.xlu0 %v1850, 122
      %v1867 = vpop.permute.xlu0 %1866
      %vm1869 = vcmask 523648
      %1870 = vst.msk [vmem:[%s278] sm:$0xff] %vm1869, %v1867
      %1871 = vrot.lane.b32.xlu0 %v1850, 120
      %v1872 = vpop.permute.xlu0 %1871
      %vm1874 = vcmask 654848
      %1875 = vst.msk [vmem:[%s278] sm:$0xff] %vm1874, %v1872
      %1876 = vrot.lane.b32.xlu0 %v1850, 118
      %v1877 = vpop.permute.xlu0 %1876
      %vm1879 = vcmask 786048
      %1880 = vst.msk [vmem:[%s278] sm:$0xff] %vm1879, %v1877
      %1881 = vrot.lane.b32.xlu0 %v1850, 116
      %v1882 = vpop.permute.xlu0 %1881
      %vm1884 = vcmask 917248
      %1885 = vst.msk [vmem:[%s278] sm:$0xff] %vm1884, %v1882
      %1887 = vrot.lane.b32.xlu0 %v1850, 114
      %v1888 = vpop.permute.xlu0 %1887
      %1889 = vrot.lane.b32.xlu0 %v1851, 114
      %v1890 = vpop.permute.xlu0 %1889
      %vm1891 = vcmask 932864
      %v1892 = vsel %vm1891, %v1888, %v1890
      %vm1894 = vcmask 1048448
      %1895 = vst.msk [vmem:[%s278] sm:$0xff] %vm1894, %v1892
      %1896 = vrot.lane.b32.xlu0 %v1851, 112
      %v1897 = vpop.permute.xlu0 %1896
      %1899 = vst.msk [vmem:[%s278 + $0x8] sm:$0xff] %vm1853, %v1897
      %1900 = vrot.lane.b32.xlu0 %v1851, 110
      %v1901 = vpop.permute.xlu0 %1900
      %1903 = vst.msk [vmem:[%s278 + $0x8] sm:$0xff] %vm1859, %v1901
      %1904 = vrot.lane.b32.xlu0 %v1851, 108
      %v1905 = vpop.permute.xlu0 %1904
      %1907 = vst.msk [vmem:[%s278 + $0x8] sm:$0xff] %vm1864, %v1905
      %1908 = vrot.lane.b32.xlu0 %v1851, 106
      %v1909 = vpop.permute.xlu0 %1908
      %1911 = vst.msk [vmem:[%s278 + $0x8] sm:$0xff] %vm1869, %v1909
      %1912 = vrot.lane.b32.xlu0 %v1851, 104
      %v1913 = vpop.permute.xlu0 %1912
      %1915 = vst.msk [vmem:[%s278 + $0x8] sm:$0xff] %vm1874, %v1913
      %1916 = vrot.lane.b32.xlu0 %v1851, 102
      %v1917 = vpop.permute.xlu0 %1916
      %1919 = vst.msk [vmem:[%s278 + $0x8] sm:$0xff] %vm1879, %v1917
      %1921 = vrot.lane.b32.xlu0 %v1851, 100
      %v1922 = vpop.permute.xlu0 %1921
      %1923 = vrot.lane.b32.xlu0 %v1852, 100
      %v1924 = vpop.permute.xlu0 %1923
      %vm1925 = vcmask 818176
      %v1926 = vsel %vm1925, %v1922, %v1924
      %1928 = vst.msk [vmem:[%s278 + $0x8] sm:$0xff] %vm1884, %v1926
      %1929 = vrot.lane.b32.xlu0 %v1852, 98
      %v1930 = vpop.permute.xlu0 %1929
      %1932 = vst.msk [vmem:[%s278 + $0x8] sm:$0xff] %vm1894, %v1930
      %p1933 = scmp.lt.s32.totalorder %s18, 1
      %s1934 = scalar_select %p1933, %s18, 1
      %s1935 = smul.addr %s1934, 2
      %s1936 = smul.addr %s1935, 8
      %s1937 = scalar_lea.vmem %s7, %s1936
      // Predicated region
      $region49: #{double_conv.1} parent=47 // pred_check
        %p1938 = pneg %p188
      $region50: #{double_conv.1} parent=47 // pred_check_branch
        %1940 = sbr.rel (%p1938) target = $region52
      $region51: #{double_conv.1} parent=47 // pred_region
        _
      $region52: #{double_conv.1} parent=47 // pred_fallthru
        _
    $region48: #{double_conv.1} parent=5 // pred_fallthru
      _
    %p1941 = scmp.le.s32.totalorder 2, %s13
    // Predicated region
    $region53: #{double_conv.1} parent=5 // pred_check
      %p1942 = pneg %p1941
    $region54: #{double_conv.1} parent=5 // pred_check_branch
      %1944 = sbr.rel (%p1942) target = $region56
    $region55: #{double_conv.1} parent=5 // pred_region
      %s1945 = ssub.s32 %s13, 2
      // Predicated region
      $region57: #{double_conv.1} parent=55 // pred_check
        %p1946 = pneg %p194
      $region58: #{double_conv.1} parent=55 // pred_check_branch
        %1948 = sbr.rel (%p1946) target = $region60
      $region59: #{double_conv.1} parent=55 // pred_region
        %p1949 = scmp.lt.s32.totalorder %s19, 1
        %s1950 = scalar_select %p1949, %s19, 1
        %s1951 = smul.addr %s1950, 2
        %s1952 = smul.addr %s1951, 8
        %s1953 = scalar_lea.vmem %s7, %s1952
      $region60: #{double_conv.1} parent=55 // pred_fallthru
        _
    $region56: #{double_conv.1} parent=5 // pred_fallthru
      _
  $region6: #{double_conv.1} parent=0 // loop_footer
    %s17 = sadd.s32 1, %s13
  $region7: #{double_conv.1} parent=0 // loop_footer_branch
    %12 = sbr.rel target = $region3
  $region8: #{double_conv.1} parent=0 // loop_exit
    _

</llo_original>
